<compile_context>
chip_gen: v5e
topology: v5e:2x2
jax: 0.10.0
libtpu: 0.0.40
codegen_flags: <defaults>
</compile_context>

<pallas_src>
import functools

import jax
import jax.numpy as jnp
from jax import lax
from jax.experimental import pallas as pl
from jax.experimental.pallas import tpu as pltpu

NUM_ROUTING_ITERS = 3


def _digitcaps_kernel(x_ref, w_hbm_ref, o_ref,
                      w_ref, wc_ref, b_ij_ref, p_acc_ref, dma_sem,
                      *, n_caps, n_out, n_in, n_routes, inv_batch):
    # x_ref    : (Bt, I*R)   batch tile, columns ordered (i, r), r fastest (lanes)
    # w_hbm_ref: (C*O, I*R)  weights, raw HBM ref (memory_space=pl.ANY)
    # o_ref    : (Bt, C*O)   lane-dense output slab for this batch tile
    # w_ref    : (C*O, I*R)  VMEM copy of W             (persistent scratch)
    # wc_ref   : (C*O, I*R)  c_ij-folded weights        (persistent scratch)
    # b_ij_ref : (C, R)      routing logits             (persistent scratch)
    # p_acc_ref: (C*O, I*R)  sum_b v[b,(c,o)] x[b,(i,r)](persistent scratch)
    it = pl.program_id(0)              # routing iteration (outer, sequential)
    bt = pl.program_id(1)              # batch tile        (inner, sequential)
    n_bt = pl.num_programs(1)
    last_iter = NUM_ROUTING_ITERS - 1
    hi = lax.Precision.HIGHEST

    @pl.when(jnp.logical_and(it == 0, bt == 0))
    def _first_step():
        b_ij_ref[...] = jnp.zeros(b_ij_ref.shape, jnp.float32)
        cp = pltpu.make_async_copy(w_hbm_ref, w_ref, dma_sem)
        cp.start()
        cp.wait()

    @pl.when(bt == 0)
    def _per_iteration_setup():
        # c_ij = softmax of b_ij over routes (legacy F.softmax dim=1), shared
        # across the whole batch, so it is computed once per iteration.
        b = b_ij_ref[...]
        e = jnp.exp(b - jnp.max(b, axis=-1, keepdims=True))
        c = e / jnp.sum(e, axis=-1, keepdims=True)                    # (C, R)
        # Fold c_ij into W:  Wc[(c,o),(i,r)] = W[(c,o),(i,r)] * c[c, r].
        # Static (c, i) slice loops -> only plain 2-D broadcasts, no reshapes.
        for ci in range(n_caps):
            c_row = c[ci:ci + 1, :]                                   # (1, R)
            rows = slice(ci * n_out, (ci + 1) * n_out)
            for i in range(n_in):
                cols = slice(i * n_routes, (i + 1) * n_routes)
                wc_ref[rows, cols] = w_ref[rows, cols] * c_row
        p_acc_ref[...] = jnp.zeros(p_acc_ref.shape, jnp.float32)

    # s_j[b,(c,o)] = sum_{i,r} x[b,(i,r)] * Wc[(c,o),(i,r)]   -- MXU matmul.
    x_tile = x_ref[...]
    s = lax.dot_general(x_tile, wc_ref[...],
                        dimension_numbers=(((1,), (1,)), ((), ())),
                        precision=hi,
                        preferred_element_type=jnp.float32)           # (Bt, C*O)

    # squash over the size-1 trailing dim of the original: s*|s|/(1+s^2)
    # (exact algebraic rewrite, avoids the 0/0 hazard of the sqrt form).
    v = (s * jnp.abs(s)) / (1.0 + s * s)                              # (Bt, C*O)
    # Written every iteration so every flushed output block holds defined data;
    # the last iteration's write is the final result.
    o_ref[...] = v.astype(o_ref.dtype)

    @pl.when(it < last_iter)
    def _accumulate_agreement():
        # P[(c,o),(i,r)] += sum_b v[b,(c,o)] * x[b,(i,r)]  -- MXU matmul.
        vt = jnp.transpose(v)                                         # (C*O, Bt)
        p_acc_ref[...] += lax.dot_general(
            vt, x_tile, dimension_numbers=(((1,), (0,)), ((), ())),
            precision=hi, preferred_element_type=jnp.float32)         # (C*O, I*R)

    @pl.when(jnp.logical_and(bt == n_bt - 1, it < last_iter))
    def _update_logits():
        # b_ij[c,r] += (1/B) * sum_{o,i} W[(c,o),(i,r)] * P[(c,o),(i,r)]
        e_full = w_ref[...] * p_acc_ref[...]                          # (C*O, I*R)
        e_r = e_full[:, 0:n_routes]
        for i in range(1, n_in):
            e_r = e_r + e_full[:, i * n_routes:(i + 1) * n_routes]    # (C*O, R)
        for ci in range(n_caps):
            rows = slice(ci * n_out, (ci + 1) * n_out)
            delta = jnp.sum(e_r[rows, :], axis=0, keepdims=True)      # (1, R)
            b_ij_ref[ci:ci + 1, :] = (b_ij_ref[ci:ci + 1, :]
                                      + delta * inv_batch)


def digit_caps_forward(x, W, *, vmem_budget_bytes=40 * 1024 * 1024):
    """x: (B, R, I) f32;  W: (1, R, C, O, I) f32  ->  (B, C, O, 1) f32."""
    B, R, I = x.shape
    _, _, C, O, _ = W.shape
    K = I * R
    CO = C * O

    # Lane-dense 2-D layouts (wrapper-side layout plumbing only):
    #   x2d[b, i*R + r]     = x[b, r, i]        (routes r fastest, on lanes)
    #   w2d[c*O + o, i*R+r] = W[0, r, c, o, i]
    x2d = jnp.transpose(x, (0, 2, 1)).reshape(B, K)
    w2d = jnp.transpose(W[0], (1, 2, 3, 0)).reshape(CO, K)

    # Batch tile derived from a VMEM budget (conservative: also fits v7x's
    # 64 MiB physical VMEM).  Fixed cost: W / Wc / P scratches + temps.
    fixed = 4 * (4 * CO * K + C * R)
    per_row = 4 * (2 * K + 8 * CO)          # double-buffered x tile, out, temps
    bt_cap = max(8, (vmem_budget_bytes - fixed) // per_row)
    if B <= bt_cap:
        block_b, n_bt = B, 1                # whole batch resident, x fetched once
    else:
        block_b = max(8, min(bt_cap, 1024) // 8 * 8)
        n_bt = pl.cdiv(B, block_b)
    B_pad = n_bt * block_b
    if B_pad != B:
        # Zero rows squash to zero and contribute nothing to the batch-mean
        # b_ij update (inv_batch uses the true B), so padding is safe.
        x2d = jnp.concatenate(
            [x2d, jnp.zeros((B_pad - B, K), x2d.dtype)], axis=0)

    est = fixed + per_row * block_b
    vmem_limit = int(min(56 * 1024 * 1024, max(2 * est, 16 * 1024 * 1024)))

    kernel = functools.partial(
        _digitcaps_kernel, n_caps=C, n_out=O, n_in=I, n_routes=R,
        inv_batch=1.0 / B)

    v2d = pl.pallas_call(
        kernel,
        out_shape=jax.ShapeDtypeStruct((B_pad, CO), jnp.float32),
        grid_spec=pltpu.PrefetchScalarGridSpec(
            num_scalar_prefetch=0,
            grid=(NUM_ROUTING_ITERS, n_bt),
            in_specs=[
                # n_bt == 1 -> constant index map -> x fetched once and kept
                # resident across all routing iterations.
                pl.BlockSpec((block_b, K), lambda it, bt: (bt, 0)),
                # W stays in HBM; copied once into a VMEM scratch in-kernel
                # (avoids double-buffering a constant operand).
                pl.BlockSpec(memory_space=pl.ANY),
            ],
            out_specs=pl.BlockSpec((block_b, CO), lambda it, bt: (bt, 0)),
            scratch_shapes=[
                pltpu.VMEM((CO, K), jnp.float32),   # W (VMEM copy)
                pltpu.VMEM((CO, K), jnp.float32),   # Wc = W * c_ij
                pltpu.VMEM((C, R), jnp.float32),    # b_ij routing logits
                pltpu.VMEM((CO, K), jnp.float32),   # P = sum_b v x^T accumulator
                pltpu.SemaphoreType.DMA,            # one-shot W copy
            ],
        ),
        compiler_params=pltpu.CompilerParams(
            # Both grid axes are coupled through the batch-shared b_ij, so they
            # must be sequential.
            # TODO(synk): v7x could split batch tiles across the 2 TensorCores
            # with per-core partial P + a core barrier before the b_ij update.
            dimension_semantics=("arbitrary", "arbitrary"),
            vmem_limit_bytes=vmem_limit,
        ),
    )(x2d, w2d)

    return v2d[:B].reshape(B, C, O)[..., None]      # (B, C, O, 1)


def digit_caps_reference(x, W):
    """Pure-JAX transcription of the PyTorch forward, for verification."""
    B, R, I = x.shape
    _, _, C, O, _ = W.shape
    hi = lax.Precision.HIGHEST
    x_ = jnp.broadcast_to(x[:, :, None, :], (B, R, C, I))[..., None]   # (B,R,C,I,1)
    Wb = jnp.broadcast_to(W, (B, R, C, O, I))
    u_hat = jnp.matmul(Wb, x_, precision=hi)                           # (B,R,C,O,1)
    b_ij = jnp.zeros((1, R, C, 1), jnp.float32)
    v_j = None
    for it in range(NUM_ROUTING_ITERS):
        c_ij = jax.nn.softmax(b_ij, axis=1)                            # legacy dim=1
        c_ij = jnp.broadcast_to(c_ij, (B, R, C, 1))[..., None]
        s_j = jnp.sum(c_ij * u_hat, axis=1, keepdims=True)             # (B,1,C,O,1)
        sn = jnp.sum(s_j ** 2, axis=-1, keepdims=True)
        v_j = sn * s_j / ((1.0 + sn) * jnp.sqrt(sn))
        if it < NUM_ROUTING_ITERS - 1:
            a = jnp.matmul(jnp.swapaxes(u_hat, 3, 4),
                           jnp.broadcast_to(v_j, (B, R, C, O, 1)),
                           precision=hi)                               # (B,R,C,1,1)
            b_ij = b_ij + jnp.mean(a[..., 0], axis=0, keepdims=True)
    return v_j[:, 0]                                                   # (B,C,O,1)


if __name__ == "__main__":
    # Small shapes consistent with the module: batch=2, num_routes=64,
    # num_capsules=1, in_channels=8, out_channels=16.
    B, R, C, I, O = 2, 64, 1, 8, 16

    key = jax.random.PRNGKey(0)
    kx, kw = jax.random.split(key)
    x = jax.random.normal(kx, (B, R, I), dtype=jnp.float32)
    W = jax.random.normal(kw, (1, R, C, O, I), dtype=jnp.float32)

    out = jax.block_until_ready(digit_caps_forward(x, W))
    ref = jax.block_until_ready(digit_caps_reference(x, W))

    assert out.shape == (B, C, O, 1), out.shape
    assert jnp.allclose(out, ref, rtol=5e-3, atol=1e-4), (
        "mismatch vs reference, max abs err = %g"
        % float(jnp.max(jnp.abs(out - ref))))
    print("KERNEL_OK")
</pallas_src>

<mosaic_0001>
module attributes {stable_mosaic.version = 11 : i64} {
  func.func @_digitcaps_kernel(%arg0: i32, %arg1: i32, %arg2: memref<2x512xf32, #tpu.memory_space<vmem>>, %arg3: memref<16x512xf32, #tpu.memory_space<any>>, %arg4: memref<2x16xf32, #tpu.memory_space<vmem>>, %arg5: memref<16x512xf32, #tpu.memory_space<vmem>>, %arg6: memref<16x512xf32, #tpu.memory_space<vmem>>, %arg7: memref<1x64xf32, #tpu.memory_space<vmem>>, %arg8: memref<16x512xf32, #tpu.memory_space<vmem>>, %arg9: memref<!tpu.dma_semaphore, #tpu.memory_space<semaphore_mem>>) attributes {dimension_semantics = [#tpu.dimension_semantics<arbitrary>, #tpu.dimension_semantics<arbitrary>], iteration_bounds = array<i64: 3, 1>, scalar_prefetch = 0 : i64, scratch_operands = 5 : i64, tpu.core_type = #tpu.core_type<tc>, window_params = [{transform_indices = @transform_0, window_bounds = array<i64: 2, 512>}, {}, {transform_indices = @transform_2, window_bounds = array<i64: 2, 16>}]} {
    %c0_i32 = arith.constant 0 : i32
    %0 = arith.cmpi eq, %arg0, %c0_i32 : i32
    %c0_i32_0 = arith.constant 0 : i32
    %1 = arith.cmpi eq, %arg1, %c0_i32_0 : i32
    %2 = arith.andi %0, %1 : i1
    %3 = arith.extui %2 : i1 to i32
    %c0_i32_1 = arith.constant 0 : i32
    %4 = arith.cmpi ne, %3, %c0_i32_1 : i32
    scf.if %4 {
      %cst_14 = arith.constant 0.000000e+00 : f32
      %26 = vector.broadcast %cst_14 : f32 to vector<1x64xf32>
      %c0_15 = arith.constant 0 : index
      %c0_16 = arith.constant 0 : index
      %27 = vector.load %arg7[%c0_15, %c0_16] : memref<1x64xf32, #tpu.memory_space<vmem>>, vector<1x64xf32>
      tpu.vector_store %arg7[%c0_15, %c0_16], %26 {strides = array<i32>} : memref<1x64xf32, #tpu.memory_space<vmem>>, vector<1x64xf32>,
      tpu.enqueue_dma source(%arg3 : memref<16x512xf32, #tpu.memory_space<any>>) target(%arg5 : memref<16x512xf32, #tpu.memory_space<vmem>>) target_semaphore(%arg9 : memref<!tpu.dma_semaphore, #tpu.memory_space<semaphore_mem>>)
      tpu.wait_dma2 semaphore(%arg9 : memref<!tpu.dma_semaphore, #tpu.memory_space<semaphore_mem>>) src(%arg3 : memref<16x512xf32, #tpu.memory_space<any>>) dst(%arg5 : memref<16x512xf32, #tpu.memory_space<vmem>>)
    } else {
    }
    %c0_i32_2 = arith.constant 0 : i32
    %5 = arith.cmpi eq, %arg1, %c0_i32_2 : i32
    %6 = arith.extui %5 : i1 to i32
    %c0_i32_3 = arith.constant 0 : i32
    %7 = arith.cmpi ne, %6, %c0_i32_3 : i32
    scf.if %7 {
      %c0_14 = arith.constant 0 : index
      %c0_15 = arith.constant 0 : index
      %26 = vector.load %arg7[%c0_14, %c0_15] : memref<1x64xf32, #tpu.memory_space<vmem>>, vector<1x64xf32>
      %cst_16 = arith.constant dense<0xFF800000> : vector<1xf32>
      %27 = vector.multi_reduction <maximumf>, %26, %cst_16 [1] : vector<1x64xf32> to vector<1xf32>
      %28 = vector.shape_cast %27 : vector<1xf32> to vector<1x1xf32>
      %29 = vector.broadcast %28 : vector<1x1xf32> to vector<1x64xf32>
      %30 = arith.subf %26, %29 : vector<1x64xf32>
      %31 = math.exp %30 : vector<1x64xf32>
      %cst_17 = arith.constant dense<0.000000e+00> : vector<1xf32>
      %32 = vector.multi_reduction <add>, %31, %cst_17 [1] : vector<1x64xf32> to vector<1xf32>
      %33 = vector.shape_cast %32 : vector<1xf32> to vector<1x1xf32>
      %34 = vector.broadcast %33 : vector<1x1xf32> to vector<1x64xf32>
      %35 = arith.divf %31, %34 : vector<1x64xf32>
      %c0_18 = arith.constant 0 : index
      %c0_19 = arith.constant 0 : index
      %36 = vector.load %arg5[%c0_18, %c0_19] : memref<16x512xf32, #tpu.memory_space<vmem>>, vector<16x64xf32>
      %37 = vector.broadcast %35 : vector<1x64xf32> to vector<16x64xf32>
      %38 = arith.mulf %36, %37 : vector<16x64xf32>
      %c0_20 = arith.constant 0 : index
      %c0_21 = arith.constant 0 : index
      %39 = vector.load %arg6[%c0_20, %c0_21] : memref<16x512xf32, #tpu.memory_space<vmem>>, vector<16x64xf32>
      tpu.vector_store %arg6[%c0_20, %c0_21], %38 {strides = array<i32>} : memref<16x512xf32, #tpu.memory_space<vmem>>, vector<16x64xf32>,
      %c0_22 = arith.constant 0 : index
      %c64 = arith.constant 64 : index
      %40 = vector.load %arg5[%c0_22, %c64] : memref<16x512xf32, #tpu.memory_space<vmem>>, vector<16x64xf32>
      %41 = vector.broadcast %35 : vector<1x64xf32> to vector<16x64xf32>
      %42 = arith.mulf %40, %41 : vector<16x64xf32>
      %c0_23 = arith.constant 0 : index
      %c64_24 = arith.constant 64 : index
      %43 = vector.load %arg6[%c0_23, %c64_24] : memref<16x512xf32, #tpu.memory_space<vmem>>, vector<16x64xf32>
      tpu.vector_store %arg6[%c0_23, %c64_24], %42 {strides = array<i32>} : memref<16x512xf32, #tpu.memory_space<vmem>>, vector<16x64xf32>,
      %c0_25 = arith.constant 0 : index
      %c128 = arith.constant 128 : index
      %44 = vector.load %arg5[%c0_25, %c128] : memref<16x512xf32, #tpu.memory_space<vmem>>, vector<16x64xf32>
      %45 = vector.broadcast %35 : vector<1x64xf32> to vector<16x64xf32>
      %46 = arith.mulf %44, %45 : vector<16x64xf32>
      %c0_26 = arith.constant 0 : index
      %c128_27 = arith.constant 128 : index
      %47 = vector.load %arg6[%c0_26, %c128_27] : memref<16x512xf32, #tpu.memory_space<vmem>>, vector<16x64xf32>
      tpu.vector_store %arg6[%c0_26, %c128_27], %46 {strides = array<i32>} : memref<16x512xf32, #tpu.memory_space<vmem>>, vector<16x64xf32>,
      %c0_28 = arith.constant 0 : index
      %c192 = arith.constant 192 : index
      %48 = vector.load %arg5[%c0_28, %c192] : memref<16x512xf32, #tpu.memory_space<vmem>>, vector<16x64xf32>
      %49 = vector.broadcast %35 : vector<1x64xf32> to vector<16x64xf32>
      %50 = arith.mulf %48, %49 : vector<16x64xf32>
      %c0_29 = arith.constant 0 : index
      %c192_30 = arith.constant 192 : index
      %51 = vector.load %arg6[%c0_29, %c192_30] : memref<16x512xf32, #tpu.memory_space<vmem>>, vector<16x64xf32>
      tpu.vector_store %arg6[%c0_29, %c192_30], %50 {strides = array<i32>} : memref<16x512xf32, #tpu.memory_space<vmem>>, vector<16x64xf32>,
      %c0_31 = arith.constant 0 : index
      %c256 = arith.constant 256 : index
      %52 = vector.load %arg5[%c0_31, %c256] : memref<16x512xf32, #tpu.memory_space<vmem>>, vector<16x64xf32>
      %53 = vector.broadcast %35 : vector<1x64xf32> to vector<16x64xf32>
      %54 = arith.mulf %52, %53 : vector<16x64xf32>
      %c0_32 = arith.constant 0 : index
      %c256_33 = arith.constant 256 : index
      %55 = vector.load %arg6[%c0_32, %c256_33] : memref<16x512xf32, #tpu.memory_space<vmem>>, vector<16x64xf32>
      tpu.vector_store %arg6[%c0_32, %c256_33], %54 {strides = array<i32>} : memref<16x512xf32, #tpu.memory_space<vmem>>, vector<16x64xf32>,
      %c0_34 = arith.constant 0 : index
      %c320 = arith.constant 320 : index
      %56 = vector.load %arg5[%c0_34, %c320] : memref<16x512xf32, #tpu.memory_space<vmem>>, vector<16x64xf32>
      %57 = vector.broadcast %35 : vector<1x64xf32> to vector<16x64xf32>
      %58 = arith.mulf %56, %57 : vector<16x64xf32>
      %c0_35 = arith.constant 0 : index
      %c320_36 = arith.constant 320 : index
      %59 = vector.load %arg6[%c0_35, %c320_36] : memref<16x512xf32, #tpu.memory_space<vmem>>, vector<16x64xf32>
      tpu.vector_store %arg6[%c0_35, %c320_36], %58 {strides = array<i32>} : memref<16x512xf32, #tpu.memory_space<vmem>>, vector<16x64xf32>,
      %c0_37 = arith.constant 0 : index
      %c384 = arith.constant 384 : index
      %60 = vector.load %arg5[%c0_37, %c384] : memref<16x512xf32, #tpu.memory_space<vmem>>, vector<16x64xf32>
      %61 = vector.broadcast %35 : vector<1x64xf32> to vector<16x64xf32>
      %62 = arith.mulf %60, %61 : vector<16x64xf32>
      %c0_38 = arith.constant 0 : index
      %c384_39 = arith.constant 384 : index
      %63 = vector.load %arg6[%c0_38, %c384_39] : memref<16x512xf32, #tpu.memory_space<vmem>>, vector<16x64xf32>
      tpu.vector_store %arg6[%c0_38, %c384_39], %62 {strides = array<i32>} : memref<16x512xf32, #tpu.memory_space<vmem>>, vector<16x64xf32>,
      %c0_40 = arith.constant 0 : index
      %c448 = arith.constant 448 : index
      %64 = vector.load %arg5[%c0_40, %c448] : memref<16x512xf32, #tpu.memory_space<vmem>>, vector<16x64xf32>
      %65 = vector.broadcast %35 : vector<1x64xf32> to vector<16x64xf32>
      %66 = arith.mulf %64, %65 : vector<16x64xf32>
      %c0_41 = arith.constant 0 : index
      %c448_42 = arith.constant 448 : index
      %67 = vector.load %arg6[%c0_41, %c448_42] : memref<16x512xf32, #tpu.memory_space<vmem>>, vector<16x64xf32>
      tpu.vector_store %arg6[%c0_41, %c448_42], %66 {strides = array<i32>} : memref<16x512xf32, #tpu.memory_space<vmem>>, vector<16x64xf32>,
      %cst_43 = arith.constant 0.000000e+00 : f32
      %68 = vector.broadcast %cst_43 : f32 to vector<16x512xf32>
      %c0_44 = arith.constant 0 : index
      %c0_45 = arith.constant 0 : index
      %69 = vector.load %arg8[%c0_44, %c0_45] : memref<16x512xf32, #tpu.memory_space<vmem>>, vector<16x512xf32>
      tpu.vector_store %arg8[%c0_44, %c0_45], %68 {strides = array<i32>} : memref<16x512xf32, #tpu.memory_space<vmem>>, vector<16x512xf32>,
    } else {
    }
    %c0 = arith.constant 0 : index
    %c0_4 = arith.constant 0 : index
    %8 = vector.load %arg2[%c0, %c0_4] : memref<2x512xf32, #tpu.memory_space<vmem>>, vector<2x512xf32>
    %c0_5 = arith.constant 0 : index
    %c0_6 = arith.constant 0 : index
    %9 = vector.load %arg6[%c0_5, %c0_6] : memref<16x512xf32, #tpu.memory_space<vmem>>, vector<16x512xf32>
    %cst = arith.constant dense<0.000000e+00> : vector<2x16xf32>
    %10 = tpu.matmul %8, %9, %cst {dimension_numbers = #tpu.dot_dimension_numbers<[1], [1], [0], [0], [0, 0, 1, 0], [], []>, precision = #tpu.contract_precision<fp32>} : vector<2x512xf32>, vector<16x512xf32>, vector<2x16xf32> -> vector<2x16xf32>
    %11 = math.absf %10 : vector<2x16xf32>
    %12 = arith.mulf %10, %11 : vector<2x16xf32>
    %13 = arith.mulf %10, %10 : vector<2x16xf32>
    %cst_7 = arith.constant 1.000000e+00 : f32
    %14 = vector.broadcast %cst_7 : f32 to vector<2x16xf32>
    %15 = arith.addf %14, %13 : vector<2x16xf32>
    %16 = arith.divf %12, %15 : vector<2x16xf32>
    %c0_8 = arith.constant 0 : index
    %c0_9 = arith.constant 0 : index
    %17 = vector.load %arg4[%c0_8, %c0_9] : memref<2x16xf32, #tpu.memory_space<vmem>>, vector<2x16xf32>
    tpu.vector_store %arg4[%c0_8, %c0_9], %16 {strides = array<i32>} : memref<2x16xf32, #tpu.memory_space<vmem>>, vector<2x16xf32>,
    %c2_i32 = arith.constant 2 : i32
    %18 = arith.cmpi slt, %arg0, %c2_i32 : i32
    %19 = arith.extui %18 : i1 to i32
    %c0_i32_10 = arith.constant 0 : i32
    %20 = arith.cmpi ne, %19, %c0_i32_10 : i32
    scf.if %20 {
      %26 = tpu.transpose %16, [1, 0] : vector<2x16xf32> -> vector<16x2xf32>
      %c0_14 = arith.constant 0 : index
      %c0_15 = arith.constant 0 : index
      %27 = vector.load %arg8[%c0_14, %c0_15] : memref<16x512xf32, #tpu.memory_space<vmem>>, vector<16x512xf32>
      %cst_16 = arith.constant dense<0.000000e+00> : vector<16x512xf32>
      %28 = tpu.matmul %26, %8, %cst_16 {dimension_numbers = #tpu.dot_dimension_numbers<[1], [0], [0], [1], [0, 0, 1, 1], [], []>, precision = #tpu.contract_precision<fp32>} : vector<16x2xf32>, vector<2x512xf32>, vector<16x512xf32> -> vector<16x512xf32>
      %29 = arith.addf %27, %28 : vector<16x512xf32>
      %c0_17 = arith.constant 0 : index
      %c0_18 = arith.constant 0 : index
      %30 = vector.load %arg8[%c0_17, %c0_18] : memref<16x512xf32, #tpu.memory_space<vmem>>, vector<16x512xf32>
      tpu.vector_store %arg8[%c0_17, %c0_18], %29 {strides = array<i32>} : memref<16x512xf32, #tpu.memory_space<vmem>>, vector<16x512xf32>,
    } else {
    }
    %c0_i32_11 = arith.constant 0 : i32
    %21 = arith.cmpi eq, %arg1, %c0_i32_11 : i32
    %c2_i32_12 = arith.constant 2 : i32
    %22 = arith.cmpi slt, %arg0, %c2_i32_12 : i32
    %23 = arith.andi %21, %22 : i1
    %24 = arith.extui %23 : i1 to i32
    %c0_i32_13 = arith.constant 0 : i32
    %25 = arith.cmpi ne, %24, %c0_i32_13 : i32
    scf.if %25 {
      %c0_14 = arith.constant 0 : index
      %c0_15 = arith.constant 0 : index
      %26 = vector.load %arg5[%c0_14, %c0_15] : memref<16x512xf32, #tpu.memory_space<vmem>>, vector<16x512xf32>
      %c0_16 = arith.constant 0 : index
      %c0_17 = arith.constant 0 : index
      %27 = vector.load %arg8[%c0_16, %c0_17] : memref<16x512xf32, #tpu.memory_space<vmem>>, vector<16x512xf32>
      %28 = arith.mulf %26, %27 : vector<16x512xf32>
      %29 = vector.extract_strided_slice %28 {offsets = [0, 0], sizes = [16, 64], strides = [1, 1]} : vector<16x512xf32> to vector<16x64xf32>
      %30 = vector.extract_strided_slice %28 {offsets = [0, 64], sizes = [16, 64], strides = [1, 1]} : vector<16x512xf32> to vector<16x64xf32>
      %31 = arith.addf %29, %30 : vector<16x64xf32>
      %32 = vector.extract_strided_slice %28 {offsets = [0, 128], sizes = [16, 64], strides = [1, 1]} : vector<16x512xf32> to vector<16x64xf32>
      %33 = arith.addf %31, %32 : vector<16x64xf32>
      %34 = vector.extract_strided_slice %28 {offsets = [0, 192], sizes = [16, 64], strides = [1, 1]} : vector<16x512xf32> to vector<16x64xf32>
      %35 = arith.addf %33, %34 : vector<16x64xf32>
      %36 = vector.extract_strided_slice %28 {offsets = [0, 256], sizes = [16, 64], strides = [1, 1]} : vector<16x512xf32> to vector<16x64xf32>
      %37 = arith.addf %35, %36 : vector<16x64xf32>
      %38 = vector.extract_strided_slice %28 {offsets = [0, 320], sizes = [16, 64], strides = [1, 1]} : vector<16x512xf32> to vector<16x64xf32>
      %39 = arith.addf %37, %38 : vector<16x64xf32>
      %40 = vector.extract_strided_slice %28 {offsets = [0, 384], sizes = [16, 64], strides = [1, 1]} : vector<16x512xf32> to vector<16x64xf32>
      %41 = arith.addf %39, %40 : vector<16x64xf32>
      %42 = vector.extract_strided_slice %28 {offsets = [0, 448], sizes = [16, 64], strides = [1, 1]} : vector<16x512xf32> to vector<16x64xf32>
      %43 = arith.addf %41, %42 : vector<16x64xf32>
      %cst_18 = arith.constant dense<0.000000e+00> : vector<64xf32>
      %44 = vector.multi_reduction <add>, %43, %cst_18 [0] : vector<16x64xf32> to vector<64xf32>
      %45 = vector.shape_cast %44 : vector<64xf32> to vector<1x64xf32>
      %c0_19 = arith.constant 0 : index
      %c0_20 = arith.constant 0 : index
      %46 = vector.load %arg7[%c0_19, %c0_20] : memref<1x64xf32, #tpu.memory_space<vmem>>, vector<1x64xf32>
      %cst_21 = arith.constant 5.000000e-01 : f32
      %47 = vector.broadcast %cst_21 : f32 to vector<1x64xf32>
      %48 = arith.mulf %45, %47 : vector<1x64xf32>
      %49 = arith.addf %46, %48 : vector<1x64xf32>
      %c0_22 = arith.constant 0 : index
      %c0_23 = arith.constant 0 : index
      %50 = vector.load %arg7[%c0_22, %c0_23] : memref<1x64xf32, #tpu.memory_space<vmem>>, vector<1x64xf32>
      tpu.vector_store %arg7[%c0_22, %c0_23], %49 {strides = array<i32>} : memref<1x64xf32, #tpu.memory_space<vmem>>, vector<1x64xf32>,
    } else {
    }
    return
  }
  func.func @transform_0(%arg0: i32, %arg1: i32) -> (i32, i32) {
    %c0_i32 = arith.constant 0 : i32
    %c0_i32_0 = arith.constant 0 : i32
    return %arg1, %c0_i32 : i32, i32
  }
  func.func @transform_2(%arg0: i32, %arg1: i32) -> (i32, i32) {
    %c0_i32 = arith.constant 0 : i32
    %c0_i32_0 = arith.constant 0 : i32
    return %arg1, %c0_i32 : i32, i32
  }
}

</mosaic_0001>

<llo_original>
// kernel: tpu_custom_call.1
$region0: #{tpu_custom_call.1}
  #allocation0 [shape = 'u32[]', space=smem, size = 0x4, offset = 0x4, fixed_abs, tag = 'smem constant byte address 0x4 - core index']
  #allocation1 [shape = 'u32[72,128]{1,0:T(1,128)}', space=vmem, size = 0x9000, scoped, tag = 'internal scratch']
  #allocation2 [shape = 'f32[16,512]{1,0:T(8,128)}', space=vmem, size = 0x8000, scoped, tag = 'scratch operand']
  #allocation3 [shape = 'f32[16,512]{1,0:T(8,128)}', space=vmem, size = 0x8000, scoped, tag = 'scratch operand']
  #allocation4 [shape = 'f32[1,64]{1,0:T(1,128)}', space=vmem, size = 0x200, scoped, tag = 'scratch operand']
  #allocation5 [shape = 'f32[16,512]{1,0:T(8,128)}', space=vmem, size = 0x8000, scoped, tag = 'scratch operand']
  #allocation6 [shape = 's32[1]{0}', space=sflag, size = 0x4, scoped, tag = 'scratch operand']
  #allocation11 [shape = 's32[]', space=sflag, size = 0x4, offset = 0, fixed_abs, tag = 'sflag constant byte address 0x0 - dummy sync flag']
  #allocation12 [shape = 's32[]', space=sflag, size = 0x4, offset = 0, fixed_abs, tag = 'sflag constant byte address 0x0 - dummy sync flag']
  #allocation13 [shape = 'u32[]', space=smem, size = 0x4, offset = 0x44, fixed_abs, tag = 'smem constant byte address 0x44 - assertion arg 0']
  #allocation14 [shape = 'u32[]', space=smem, size = 0x4, offset = 0x48, fixed_abs, tag = 'smem constant byte address 0x48 - assertion arg 1']
  %s0 = inlined_call_operand.hbm [shape: f32[2,512], index: 0, kind: input, shape index: {}]
  %s1 = inlined_call_operand.hbm [shape: f32[16,512], index: 1, kind: input, shape index: {}]
  %s2 = inlined_call_operand.hbm [shape: f32[2,16], index: 2, kind: output, shape index: {}]
  %s3 = sld [smem:[#allocation0]]
  $region61: #{tpu_custom_call.1} parent=0
    _
  %s5 = ssub.s32 1, %s3
  %s6 = scalar_select 0, %s5, %s3
  $region1: #{tpu_custom_call.1} parent=0
    #allocation7 [shape = 'u8[4096]{0}', space=vmem, size = 0x1000, scoped, tag = 'input window, operand 0, single buffered']
    #allocation8 [shape = 's32[2]{0}', space=sflag, size = 0x8, scoped, tag = 'scoped memory for tpu_custom_call.1']
    #allocation9 [shape = 's32[2]{0}', space=sflag, size = 0x8, scoped, tag = 'scoped memory for tpu_custom_call.1']
    #allocation10 [shape = 'u8[1024]{0}', space=vmem, size = 0x400, scoped, tag = 'output window, operand 0, single buffered']
    %7 = vsyncpa [#allocation8], 0
    %8 = vsyncpa [#allocation9], 0
    loop: start=0, step=1, limit=5
    $region2: #{tpu_custom_call.1} parent=1 // loop_pre_header
      _
    $region3: #{tpu_custom_call.1} parent=1 // loop_header
      %s10 = sphi 0, %s14
      %p11 = scmp.ge.s32.totalorder %s10, 5
      %s17 = sphi 0, %s29
      %s18 = sphi 0, %s25
      %s19 = sphi 0, %s17
      %s20 = sphi 0, %s18
      %s21 = sphi 0, %s19
      %s22 = sphi 0, %s20
      %s32 = sphi 0, %s34
      %s35 = sphi 0, %s32
      %s36 = sphi 0, %s35
      %s52 = sphi 0, %s36
      %s58 = sphi 0, %s60
      %s61 = sphi 0, %s58
      %s62 = sphi 0, %s61
      %s78 = sphi 0, %s62
    $region4: #{tpu_custom_call.1} parent=1 // loop_header_branch
      %13 = sbr.rel (%p11) target = $region8
    $region5: #{tpu_custom_call.1} parent=1 // loop_body
      %s15 = ssub.s32 %s10, 1
      %s16 = ssub.s32 %s10, 2
      %s23 = sadd.s32 1, %s18
      %p24 = scmp.ge.s32.totalorder %s23, 1
      %s25 = scalar_select %p24, 0, %s23
      %s26 = sadd.s32 1, %s17
      %s27 = scalar_select %p24, %s26, %s17
      %p28 = scmp.ge.s32.totalorder %s27, 3
      %s29 = scalar_select %p28, 0, %s27
      %s30 = ssub.s32 %s18, %s25
      %p31 = scmp.eq.s32.totalorder %s30, 0
      %s33 = sadd.s32 %s32, 1
      %s34 = scalar_select %p31, %s32, %s33
      %p37 = pneg %p31
      %p38 = scmp.eq.s32.totalorder %s10, 2
      %p39 = por %p37, %p38
      %p40 = scmp.ne.s32.totalorder %s32, %s35
      %p41 = scmp.eq.s32.totalorder %s10, 0
      %p42 = por %p40, %p41
      %p43 = scmp.ne.s32.totalorder %s32, %s35
      %p44 = scmp.eq.s32.totalorder %s15, 2
      %p45 = por %p43, %p44
      %p46 = scmp.ne.s32.totalorder %s35, %s36
      %p47 = scmp.eq.s32.totalorder %s15, 0
      %p48 = por %p46, %p47
      %p49 = scmp.ne.s32.totalorder %s35, %s36
      %p50 = scmp.eq.s32.totalorder %s16, 2
      %p51 = por %p49, %p50
      %p53 = scmp.ne.s32.totalorder %s36, %s52
      %p54 = scmp.eq.s32.totalorder %s16, 0
      %p55 = por %p53, %p54
      %s56 = ssub.s32 %s18, %s25
      %p57 = scmp.eq.s32.totalorder %s56, 0
      %s59 = sadd.s32 %s58, 1
      %s60 = scalar_select %p57, %s58, %s59
      %p63 = pneg %p57
      %p64 = scmp.eq.s32.totalorder %s10, 2
      %p65 = por %p63, %p64
      %p66 = scmp.ne.s32.totalorder %s58, %s61
      %p67 = scmp.eq.s32.totalorder %s10, 0
      %p68 = por %p66, %p67
      %p69 = scmp.ne.s32.totalorder %s58, %s61
      %p70 = scmp.eq.s32.totalorder %s15, 2
      %p71 = por %p69, %p70
      %p72 = scmp.ne.s32.totalorder %s61, %s62
      %p73 = scmp.eq.s32.totalorder %s15, 0
      %p74 = por %p72, %p73
      %p75 = scmp.ne.s32.totalorder %s61, %s62
      %p76 = scmp.eq.s32.totalorder %s16, 2
      %p77 = por %p75, %p76
      %p79 = scmp.ne.s32.totalorder %s62, %s78
      %p80 = scmp.eq.s32.totalorder %s16, 0
      %p81 = por %p79, %p80
      %p82 = scmp.le.s32.totalorder 1, %s10
      %p83 = scmp.lt.s32.totalorder %s10, 4
      %p84 = pnand %p82, %p83
      %p85 = pneg %p84
      // Predicated region
      $region9: #{tpu_custom_call.1} parent=5 // pred_check
        _
      $region10: #{tpu_custom_call.1} parent=5 // pred_check_branch
        %87 = sbr.rel (%p84) target = $region12
      $region11: #{tpu_custom_call.1} parent=5 // pred_region
        %s88 = ssub.s32 %s10, 1
        // Predicated region
        $region13: #{tpu_custom_call.1} parent=11 // pred_check
          %p89 = pneg %p48
        $region14: #{tpu_custom_call.1} parent=11 // pred_check_branch
          %91 = sbr.rel (%p89) target = $region16
        $region15: #{tpu_custom_call.1} parent=11 // pred_region
          %93 = vsyncadd [#allocation8], 0
          %s94 = smul.addr %s20, 4
          %s95 = smul.addr %s94, 2
          %s96 = scalar_lea.hbm %s0, %s95
          %s98 = sshll.u32 %s96, 4
          %s99 = int_to_ptr.hbm [resolvable:$true] %s98
          %s100 = sshll.u32 [#allocation7], 4
          %s101 = int_to_ptr.vmem [resolvable:$true] %s100
          %103 = dma.hbm_to_vmem [thread:$0]  %s99, 128, %s101, [#allocation8]
        $region16: #{tpu_custom_call.1} parent=11 // pred_fallthru
          _
      $region12: #{tpu_custom_call.1} parent=5 // pred_fallthru
        _
      %p104 = scmp.lt.s32.totalorder %s10, 3
      // Predicated region
      $region17: #{tpu_custom_call.1} parent=5 // pred_check
        %p105 = pneg %p104
      $region18: #{tpu_custom_call.1} parent=5 // pred_check_branch
        %107 = sbr.rel (%p105) target = $region20
      $region19: #{tpu_custom_call.1} parent=5 // pred_region
        _
      $region20: #{tpu_custom_call.1} parent=5 // pred_fallthru
        _
      %p108 = scmp.le.s32.totalorder 1, %s10
      %p109 = scmp.lt.s32.totalorder %s10, 4
      %p110 = pnand %p108, %p109
      %p111 = pneg %p110
      // Predicated region
      $region21: #{tpu_custom_call.1} parent=5 // pred_check
        _
      $region22: #{tpu_custom_call.1} parent=5 // pred_check_branch
        %113 = sbr.rel (%p110) target = $region24
      $region23: #{tpu_custom_call.1} parent=5 // pred_region
        %s114 = ssub.s32 %s10, 1
        // Predicated region
        $region25: #{tpu_custom_call.1} parent=23 // pred_check
          %p115 = pneg %p48
        $region26: #{tpu_custom_call.1} parent=23 // pred_check_branch
          %117 = sbr.rel (%p115) target = $region28
        $region27: #{tpu_custom_call.1} parent=23 // pred_region
          %119 = dma.done [#allocation8], 128
        $region28: #{tpu_custom_call.1} parent=23 // pred_fallthru
          _
        %p120 = pneg %p48
        %p121 = pneg %p45
        %p122 = pneg %p74
        %p123 = pneg %p71
        %p124 = scmp.eq.s32.totalorder %s19, 0
        %p125 = scmp.eq.s32.totalorder %s20, 0
        %p126 = pnand %p124, %p125
        %p127 = pneg %p126
        // Predicated region
        $region29: #{tpu_custom_call.1} parent=23 // pred_check
          _
        $region30: #{tpu_custom_call.1} parent=23 // pred_check_branch
          %129 = sbr.rel (%p126) target = $region32
        $region31: #{tpu_custom_call.1} parent=23 // pred_region
          %vm130 = vcmask 516096
          %131 = vst.msk [vmem:[#allocation4] sm:$0x1] %vm130, 0.0
          // Predicated region
          $region33: #{tpu_custom_call.1} parent=31 // pred_check
            _
          $region34: #{tpu_custom_call.1} parent=31 // pred_check_branch
            %133 = sbr.rel target = $region36
          $region35: #{tpu_custom_call.1} parent=31 // pred_region
            %134 = sst [smem:[#allocation13]] [#allocation12]
            %135 = sst [smem:[#allocation14]] [#allocation11]
          $region36: #{tpu_custom_call.1} parent=31 // pred_fallthru
            _
          %137 = shalt.err (0)
          %s139 = sshll.u32 %s1, 4
          %s140 = int_to_ptr.hbm [resolvable:$true] %s139
          %s141 = sshll.u32 [#allocation2], 4
          %s142 = int_to_ptr.vmem [resolvable:$true] %s141
          %144 = dma.hbm_to_vmem [thread:$0]  %s140, 1024, %s142, [#allocation6]
          %s145 = smul.u32 8, 2
          %s146 = smul.u32 %s145, 4
          %s147 = sshll.u32 %s146, 4
          %148 = dma.done [#allocation6], %s147
        $region32: #{tpu_custom_call.1} parent=23 // pred_fallthru
          _
        // Predicated region
        $region37: #{tpu_custom_call.1} parent=23 // pred_check
          %p149 = pneg %p125
        $region38: #{tpu_custom_call.1} parent=23 // pred_check_branch
          %151 = sbr.rel (%p149) target = $region40
        $region39: #{tpu_custom_call.1} parent=23 // pred_region
          %v152 = vld [vmem:[#allocation4] sm:$0x1]
          %vm153 = vcmask 516096
          %v154 = vsel %vm153, %v152, -inf
          %155 = vmax.xlane.f32.xlu0 %v154
          %v156 = vpop.xlane.xlu0 %155
          %v157 = vsub.f32 %v152, %v156
          %v158 = vmul.f32 %v157, 1.442695
          %v159 = vpow.pop %v158
          %v160 = vsel %vm153, %v159, 0.0
          %161 = vadd.xlane.f32.xlu0 %v160
          %v162 = vpop.xlane.xlu0 %161
          %v163 = vrcp.pop %v162
          %v164 = vmul.f32 %v162, %v163
          %v165 = vsub.f32 1.0, %v164
          %v166 = vmul.f32 %v163, %v165
          %v167 = vadd.f32 %v163, %v166
          %vm168 = vweird.f32 %v162
          %vm169 = vweird.f32 %v163
          %vm170 = vmor %vm168, %vm169
          %v171 = vsel %vm170, %v163, %v167
          %v172 = vand.u32 2147483647, %v162
          %vm173 = vcmp.eq.f32.partialorder %v172, 8.507059e+37
          %v174 = vand.u32 %v162, 2147483648
          %v175 = vor.u32 1.1754944e-38, %v174
          %v176 = vsel %vm173, %v175, %v171
          %v177 = vmul.f32 %v159, %v176
          %v178 = vld [vmem:[#allocation2] sm:$0xff]
          %v179 = vld [vmem:[#allocation2 + $0x20] sm:$0xff]
          %v181 = vperm.slane %v177, 0
          %v183 = vmul.f32 %v178, %v181
          %v184 = vmul.f32 %v179, %v181
          %vm185 = vcmask 523264
          %186 = vst.msk [vmem:[#allocation3] sm:$0xff] %vm185, %v183
          %187 = vst.msk [vmem:[#allocation3 + $0x20] sm:$0xff] %vm185, %v184
          %v188 = vld [vmem:[#allocation2] sm:$0xff]
          %v189 = vld [vmem:[#allocation2 + $0x20] sm:$0xff]
          %190 = vrot.lane.b32.xlu0 %v181, 64
          %v191 = vpop.permute.xlu0 %190
          %v193 = vmul.f32 %v188, %v191
          %v194 = vmul.f32 %v189, %v191
          %vm195 = vcmask 1048064
          %196 = vst.msk [vmem:[#allocation3] sm:$0xff] %vm195, %v193
          %197 = vst.msk [vmem:[#allocation3 + $0x20] sm:$0xff] %vm195, %v194
          %v198 = vld [vmem:[#allocation2 + $0x8] sm:$0xff]
          %v199 = vld [vmem:[#allocation2 + $0x28] sm:$0xff]
          %v200 = vmul.f32 %v198, %v181
          %v201 = vmul.f32 %v199, %v181
          %202 = vst.msk [vmem:[#allocation3 + $0x8] sm:$0xff] %vm185, %v200
          %203 = vst.msk [vmem:[#allocation3 + $0x28] sm:$0xff] %vm185, %v201
          %v204 = vld [vmem:[#allocation2 + $0x8] sm:$0xff]
          %v205 = vld [vmem:[#allocation2 + $0x28] sm:$0xff]
          %v206 = vmul.f32 %v204, %v191
          %v207 = vmul.f32 %v205, %v191
          %208 = vst.msk [vmem:[#allocation3 + $0x8] sm:$0xff] %vm195, %v206
          %209 = vst.msk [vmem:[#allocation3 + $0x28] sm:$0xff] %vm195, %v207
          %v210 = vld [vmem:[#allocation2 + $0x10] sm:$0xff]
          %v211 = vld [vmem:[#allocation2 + $0x30] sm:$0xff]
          %v212 = vmul.f32 %v210, %v181
          %v213 = vmul.f32 %v211, %v181
          %214 = vst.msk [vmem:[#allocation3 + $0x10] sm:$0xff] %vm185, %v212
          %215 = vst.msk [vmem:[#allocation3 + $0x30] sm:$0xff] %vm185, %v213
          %v216 = vld [vmem:[#allocation2 + $0x10] sm:$0xff]
          %v217 = vld [vmem:[#allocation2 + $0x30] sm:$0xff]
          %v218 = vmul.f32 %v216, %v191
          %v219 = vmul.f32 %v217, %v191
          %220 = vst.msk [vmem:[#allocation3 + $0x10] sm:$0xff] %vm195, %v218
          %221 = vst.msk [vmem:[#allocation3 + $0x30] sm:$0xff] %vm195, %v219
          %v222 = vld [vmem:[#allocation2 + $0x18] sm:$0xff]
          %v223 = vld [vmem:[#allocation2 + $0x38] sm:$0xff]
          %v224 = vmul.f32 %v222, %v181
          %v225 = vmul.f32 %v223, %v181
          %226 = vst.msk [vmem:[#allocation3 + $0x18] sm:$0xff] %vm185, %v224
          %227 = vst.msk [vmem:[#allocation3 + $0x38] sm:$0xff] %vm185, %v225
          %v228 = vld [vmem:[#allocation2 + $0x18] sm:$0xff]
          %v229 = vld [vmem:[#allocation2 + $0x38] sm:$0xff]
          %v230 = vmul.f32 %v228, %v191
          %v231 = vmul.f32 %v229, %v191
          %232 = vst.msk [vmem:[#allocation3 + $0x18] sm:$0xff] %vm195, %v230
          %233 = vst.msk [vmem:[#allocation3 + $0x38] sm:$0xff] %vm195, %v231
          %234 = vst [vmem:[#allocation5] sm:$0xff] 0.0
          %235 = vst [vmem:[#allocation5 + $0x8] sm:$0xff] 0.0
          %236 = vst [vmem:[#allocation5 + $0x10] sm:$0xff] 0.0
          %237 = vst [vmem:[#allocation5 + $0x18] sm:$0xff] 0.0
          %238 = vst [vmem:[#allocation5 + $0x20] sm:$0xff] 0.0
          %239 = vst [vmem:[#allocation5 + $0x28] sm:$0xff] 0.0
          %240 = vst [vmem:[#allocation5 + $0x30] sm:$0xff] 0.0
          %241 = vst [vmem:[#allocation5 + $0x38] sm:$0xff] 0.0
        $region40: #{tpu_custom_call.1} parent=23 // pred_fallthru
          _
        %v242 = vld [vmem:[#allocation7] sm:$0xff]
        %v243 = vld [vmem:[#allocation3] sm:$0xff]
        %v244 = vld [vmem:[#allocation3 + $0x8] sm:$0xff]
        %v245 = vld [vmem:[#allocation3 + $0x10] sm:$0xff]
        %v246 = vld [vmem:[#allocation3 + $0x18] sm:$0xff]
        %v247 = vld [vmem:[#allocation3 + $0x20] sm:$0xff]
        %v248 = vld [vmem:[#allocation3 + $0x28] sm:$0xff]
        %v249 = vld [vmem:[#allocation3 + $0x30] sm:$0xff]
        %v250 = vld [vmem:[#allocation3 + $0x38] sm:$0xff]
        %252 = vst [vmem:[#allocation1] ss:$4 sm:$0xff] %v242
        %v253 = vld.sshfl [vmem:[#allocation1] sm:$0xff pattern:$0x73625140]
        %v254 = vld.sshfl [vmem:[#allocation1 + $0x8] sm:$0xff pattern:$0x73625140]
        %v255 = vld.sshfl [vmem:[#allocation1 + $0x10] sm:$0xff pattern:$0x73625140]
        %v256 = vld.sshfl [vmem:[#allocation1 + $0x18] sm:$0xff pattern:$0x73625140]
        %261 = vmatpush.xpose.msra.mxu0 0.0
        %262 = vmatpush.xpose.msra.mxu0 0.0
        %263 = vmatpush.xpose.msra.mxu0 0.0
        %264 = vmatpush.xpose.msra.mxu0 0.0
        %265 = vmatpush.xpose.msra.mxu0 0.0
        %266 = vmatpush.xpose.msra.mxu0 0.0
        %267 = vmatpush.xpose.msra.mxu0 0.0
        %268 = vmatpush.xpose.msra.mxu0 0.0
        %269 = vmatpush.xpose.msra.mxu0 0.0
        %270 = vmatpush.xpose.msra.mxu0 0.0
        %271 = vmatpush.xpose.msra.mxu0 0.0
        %272 = vmatpush.xpose.msra.mxu0 0.0
        %273 = vmatpush.xpose.msra.mxu0 0.0
        %274 = vmatpush.xpose.msra.mxu0 0.0
        %v275 = vand.u32 %v247, 4294901760
        %276 = vmatpush.xpose.msra.mxu0 %v275
        %v277 = vand.u32 %v243, 4294901760
        %278 = vmatpush.xpose.msra.mxu0 %v277
        %v279 = vand.u32 %v253, 4294901760
        %v280 = vsub.f32 %v253, %v279
        %v281 = vand.u32 %v280, 4294901760
        %v282 = vsub.f32 %v280, %v281
        %v283 = vand.u32 %v282, 4294901760
        %284 = vmatmul.f32.gmra.mxu0 %v283
        %v285 = vpop.f32.mrf.mxu0
        %v286 = vadd.f32 0.0, %v285
        %287 = vdwg.mxu0
        %288 = vmatpush.xpose.msra.mxu0 0.0
        %289 = vmatpush.xpose.msra.mxu0 0.0
        %290 = vmatpush.xpose.msra.mxu0 0.0
        %291 = vmatpush.xpose.msra.mxu0 0.0
        %292 = vmatpush.xpose.msra.mxu0 0.0
        %293 = vmatpush.xpose.msra.mxu0 0.0
        %294 = vmatpush.xpose.msra.mxu0 0.0
        %295 = vmatpush.xpose.msra.mxu0 0.0
        %296 = vmatpush.xpose.msra.mxu0 0.0
        %297 = vmatpush.xpose.msra.mxu0 0.0
        %298 = vmatpush.xpose.msra.mxu0 0.0
        %299 = vmatpush.xpose.msra.mxu0 0.0
        %300 = vmatpush.xpose.msra.mxu0 0.0
        %301 = vmatpush.xpose.msra.mxu0 0.0
        %v302 = vand.u32 %v247, 4294901760
        %v303 = vsub.f32 %v247, %v302
        %v304 = vand.u32 %v303, 4294901760
        %v305 = vsub.f32 %v303, %v304
        %v306 = vand.u32 %v305, 4294901760
        %307 = vmatpush.xpose.msra.mxu0 %v306
        %v308 = vand.u32 %v243, 4294901760
        %v309 = vsub.f32 %v243, %v308
        %v310 = vand.u32 %v309, 4294901760
        %v311 = vsub.f32 %v309, %v310
        %v312 = vand.u32 %v311, 4294901760
        %313 = vmatpush.xpose.msra.mxu0 %v312
        %v314 = vand.u32 %v253, 4294901760
        %315 = vmatmul.f32.gmra.mxu0 %v314
        %v316 = vpop.f32.mrf.mxu0
        %v317 = vadd.f32 %v286, %v316
        %318 = vdwg.mxu0
        %319 = vmatpush.xpose.msra.mxu0 0.0
        %320 = vmatpush.xpose.msra.mxu0 0.0
        %321 = vmatpush.xpose.msra.mxu0 0.0
        %322 = vmatpush.xpose.msra.mxu0 0.0
        %323 = vmatpush.xpose.msra.mxu0 0.0
        %324 = vmatpush.xpose.msra.mxu0 0.0
        %325 = vmatpush.xpose.msra.mxu0 0.0
        %326 = vmatpush.xpose.msra.mxu0 0.0
        %327 = vmatpush.xpose.msra.mxu0 0.0
        %328 = vmatpush.xpose.msra.mxu0 0.0
        %329 = vmatpush.xpose.msra.mxu0 0.0
        %330 = vmatpush.xpose.msra.mxu0 0.0
        %331 = vmatpush.xpose.msra.mxu0 0.0
        %332 = vmatpush.xpose.msra.mxu0 0.0
        %v333 = vand.u32 %v247, 4294901760
        %v334 = vsub.f32 %v247, %v333
        %335 = vmatpush.xpose.msra.mxu0 %v334
        %v336 = vand.u32 %v243, 4294901760
        %v337 = vsub.f32 %v243, %v336
        %338 = vmatpush.xpose.msra.mxu0 %v337
        %v339 = vand.u32 %v253, 4294901760
        %v340 = vsub.f32 %v253, %v339
        %341 = vmatmul.f32.gmra.mxu0 %v340
        %v342 = vpop.f32.mrf.mxu0
        %v343 = vadd.f32 %v317, %v342
        %344 = vdwg.mxu0
        %345 = vmatpush.xpose.msra.mxu0 0.0
        %346 = vmatpush.xpose.msra.mxu0 0.0
        %347 = vmatpush.xpose.msra.mxu0 0.0
        %348 = vmatpush.xpose.msra.mxu0 0.0
        %349 = vmatpush.xpose.msra.mxu0 0.0
        %350 = vmatpush.xpose.msra.mxu0 0.0
        %351 = vmatpush.xpose.msra.mxu0 0.0
        %352 = vmatpush.xpose.msra.mxu0 0.0
        %353 = vmatpush.xpose.msra.mxu0 0.0
        %354 = vmatpush.xpose.msra.mxu0 0.0
        %355 = vmatpush.xpose.msra.mxu0 0.0
        %356 = vmatpush.xpose.msra.mxu0 0.0
        %357 = vmatpush.xpose.msra.mxu0 0.0
        %358 = vmatpush.xpose.msra.mxu0 0.0
        %v359 = vand.u32 %v247, 4294901760
        %360 = vmatpush.xpose.msra.mxu0 %v359
        %v361 = vand.u32 %v243, 4294901760
        %362 = vmatpush.xpose.msra.mxu0 %v361
        %v363 = vand.u32 %v253, 4294901760
        %v364 = vsub.f32 %v253, %v363
        %v365 = vand.u32 %v364, 4294901760
        %366 = vmatmul.f32.gmra.mxu0 %v365
        %v367 = vpop.f32.mrf.mxu0
        %v368 = vadd.f32 %v343, %v367
        %369 = vdwg.mxu0
        %370 = vmatpush.xpose.msra.mxu0 0.0
        %371 = vmatpush.xpose.msra.mxu0 0.0
        %372 = vmatpush.xpose.msra.mxu0 0.0
        %373 = vmatpush.xpose.msra.mxu0 0.0
        %374 = vmatpush.xpose.msra.mxu0 0.0
        %375 = vmatpush.xpose.msra.mxu0 0.0
        %376 = vmatpush.xpose.msra.mxu0 0.0
        %377 = vmatpush.xpose.msra.mxu0 0.0
        %378 = vmatpush.xpose.msra.mxu0 0.0
        %379 = vmatpush.xpose.msra.mxu0 0.0
        %380 = vmatpush.xpose.msra.mxu0 0.0
        %381 = vmatpush.xpose.msra.mxu0 0.0
        %382 = vmatpush.xpose.msra.mxu0 0.0
        %383 = vmatpush.xpose.msra.mxu0 0.0
        %v384 = vand.u32 %v247, 4294901760
        %v385 = vsub.f32 %v247, %v384
        %v386 = vand.u32 %v385, 4294901760
        %387 = vmatpush.xpose.msra.mxu0 %v386
        %v388 = vand.u32 %v243, 4294901760
        %v389 = vsub.f32 %v243, %v388
        %v390 = vand.u32 %v389, 4294901760
        %391 = vmatpush.xpose.msra.mxu0 %v390
        %v392 = vand.u32 %v253, 4294901760
        %393 = vmatmul.f32.gmra.mxu0 %v392
        %v394 = vpop.f32.mrf.mxu0
        %v395 = vadd.f32 %v368, %v394
        %396 = vdwg.mxu0
        %397 = vmatpush.xpose.msra.mxu0 0.0
        %398 = vmatpush.xpose.msra.mxu0 0.0
        %399 = vmatpush.xpose.msra.mxu0 0.0
        %400 = vmatpush.xpose.msra.mxu0 0.0
        %401 = vmatpush.xpose.msra.mxu0 0.0
        %402 = vmatpush.xpose.msra.mxu0 0.0
        %403 = vmatpush.xpose.msra.mxu0 0.0
        %404 = vmatpush.xpose.msra.mxu0 0.0
        %405 = vmatpush.xpose.msra.mxu0 0.0
        %406 = vmatpush.xpose.msra.mxu0 0.0
        %407 = vmatpush.xpose.msra.mxu0 0.0
        %408 = vmatpush.xpose.msra.mxu0 0.0
        %409 = vmatpush.xpose.msra.mxu0 0.0
        %410 = vmatpush.xpose.msra.mxu0 0.0
        %v411 = vand.u32 %v247, 4294901760
        %412 = vmatpush.xpose.msra.mxu0 %v411
        %v413 = vand.u32 %v243, 4294901760
        %414 = vmatpush.xpose.msra.mxu0 %v413
        %v415 = vand.u32 %v253, 4294901760
        %416 = vmatmul.f32.gmra.mxu0 %v415
        %v417 = vpop.f32.mrf.mxu0
        %v418 = vadd.f32 %v395, %v417
        %419 = vdwg.mxu0
        %420 = vmatpush.xpose.msra.mxu0 0.0
        %421 = vmatpush.xpose.msra.mxu0 0.0
        %422 = vmatpush.xpose.msra.mxu0 0.0
        %423 = vmatpush.xpose.msra.mxu0 0.0
        %424 = vmatpush.xpose.msra.mxu0 0.0
        %425 = vmatpush.xpose.msra.mxu0 0.0
        %426 = vmatpush.xpose.msra.mxu0 0.0
        %427 = vmatpush.xpose.msra.mxu0 0.0
        %428 = vmatpush.xpose.msra.mxu0 0.0
        %429 = vmatpush.xpose.msra.mxu0 0.0
        %430 = vmatpush.xpose.msra.mxu0 0.0
        %431 = vmatpush.xpose.msra.mxu0 0.0
        %432 = vmatpush.xpose.msra.mxu0 0.0
        %433 = vmatpush.xpose.msra.mxu0 0.0
        %v434 = vand.u32 %v248, 4294901760
        %435 = vmatpush.xpose.msra.mxu0 %v434
        %v436 = vand.u32 %v244, 4294901760
        %437 = vmatpush.xpose.msra.mxu0 %v436
        %v438 = vand.u32 %v254, 4294901760
        %v439 = vsub.f32 %v254, %v438
        %v440 = vand.u32 %v439, 4294901760
        %v441 = vsub.f32 %v439, %v440
        %v442 = vand.u32 %v441, 4294901760
        %443 = vmatmul.f32.gmra.mxu0 %v442
        %v444 = vpop.f32.mrf.mxu0
        %v445 = vadd.f32 %v418, %v444
        %446 = vdwg.mxu0
        %447 = vmatpush.xpose.msra.mxu0 0.0
        %448 = vmatpush.xpose.msra.mxu0 0.0
        %449 = vmatpush.xpose.msra.mxu0 0.0
        %450 = vmatpush.xpose.msra.mxu0 0.0
        %451 = vmatpush.xpose.msra.mxu0 0.0
        %452 = vmatpush.xpose.msra.mxu0 0.0
        %453 = vmatpush.xpose.msra.mxu0 0.0
        %454 = vmatpush.xpose.msra.mxu0 0.0
        %455 = vmatpush.xpose.msra.mxu0 0.0
        %456 = vmatpush.xpose.msra.mxu0 0.0
        %457 = vmatpush.xpose.msra.mxu0 0.0
        %458 = vmatpush.xpose.msra.mxu0 0.0
        %459 = vmatpush.xpose.msra.mxu0 0.0
        %460 = vmatpush.xpose.msra.mxu0 0.0
        %v461 = vand.u32 %v248, 4294901760
        %v462 = vsub.f32 %v248, %v461
        %v463 = vand.u32 %v462, 4294901760
        %v464 = vsub.f32 %v462, %v463
        %v465 = vand.u32 %v464, 4294901760
        %466 = vmatpush.xpose.msra.mxu0 %v465
        %v467 = vand.u32 %v244, 4294901760
        %v468 = vsub.f32 %v244, %v467
        %v469 = vand.u32 %v468, 4294901760
        %v470 = vsub.f32 %v468, %v469
        %v471 = vand.u32 %v470, 4294901760
        %472 = vmatpush.xpose.msra.mxu0 %v471
        %v473 = vand.u32 %v254, 4294901760
        %474 = vmatmul.f32.gmra.mxu0 %v473
        %v475 = vpop.f32.mrf.mxu0
        %v476 = vadd.f32 %v445, %v475
        %477 = vdwg.mxu0
        %478 = vmatpush.xpose.msra.mxu0 0.0
        %479 = vmatpush.xpose.msra.mxu0 0.0
        %480 = vmatpush.xpose.msra.mxu0 0.0
        %481 = vmatpush.xpose.msra.mxu0 0.0
        %482 = vmatpush.xpose.msra.mxu0 0.0
        %483 = vmatpush.xpose.msra.mxu0 0.0
        %484 = vmatpush.xpose.msra.mxu0 0.0
        %485 = vmatpush.xpose.msra.mxu0 0.0
        %486 = vmatpush.xpose.msra.mxu0 0.0
        %487 = vmatpush.xpose.msra.mxu0 0.0
        %488 = vmatpush.xpose.msra.mxu0 0.0
        %489 = vmatpush.xpose.msra.mxu0 0.0
        %490 = vmatpush.xpose.msra.mxu0 0.0
        %491 = vmatpush.xpose.msra.mxu0 0.0
        %v492 = vand.u32 %v248, 4294901760
        %v493 = vsub.f32 %v248, %v492
        %494 = vmatpush.xpose.msra.mxu0 %v493
        %v495 = vand.u32 %v244, 4294901760
        %v496 = vsub.f32 %v244, %v495
        %497 = vmatpush.xpose.msra.mxu0 %v496
        %v498 = vand.u32 %v254, 4294901760
        %v499 = vsub.f32 %v254, %v498
        %500 = vmatmul.f32.gmra.mxu0 %v499
        %v501 = vpop.f32.mrf.mxu0
        %v502 = vadd.f32 %v476, %v501
        %503 = vdwg.mxu0
        %504 = vmatpush.xpose.msra.mxu0 0.0
        %505 = vmatpush.xpose.msra.mxu0 0.0
        %506 = vmatpush.xpose.msra.mxu0 0.0
        %507 = vmatpush.xpose.msra.mxu0 0.0
        %508 = vmatpush.xpose.msra.mxu0 0.0
        %509 = vmatpush.xpose.msra.mxu0 0.0
        %510 = vmatpush.xpose.msra.mxu0 0.0
        %511 = vmatpush.xpose.msra.mxu0 0.0
        %512 = vmatpush.xpose.msra.mxu0 0.0
        %513 = vmatpush.xpose.msra.mxu0 0.0
        %514 = vmatpush.xpose.msra.mxu0 0.0
        %515 = vmatpush.xpose.msra.mxu0 0.0
        %516 = vmatpush.xpose.msra.mxu0 0.0
        %517 = vmatpush.xpose.msra.mxu0 0.0
        %v518 = vand.u32 %v248, 4294901760
        %519 = vmatpush.xpose.msra.mxu0 %v518
        %v520 = vand.u32 %v244, 4294901760
        %521 = vmatpush.xpose.msra.mxu0 %v520
        %v522 = vand.u32 %v254, 4294901760
        %v523 = vsub.f32 %v254, %v522
        %v524 = vand.u32 %v523, 4294901760
        %525 = vmatmul.f32.gmra.mxu0 %v524
        %v526 = vpop.f32.mrf.mxu0
        %v527 = vadd.f32 %v502, %v526
        %528 = vdwg.mxu0
        %529 = vmatpush.xpose.msra.mxu0 0.0
        %530 = vmatpush.xpose.msra.mxu0 0.0
        %531 = vmatpush.xpose.msra.mxu0 0.0
        %532 = vmatpush.xpose.msra.mxu0 0.0
        %533 = vmatpush.xpose.msra.mxu0 0.0
        %534 = vmatpush.xpose.msra.mxu0 0.0
        %535 = vmatpush.xpose.msra.mxu0 0.0
        %536 = vmatpush.xpose.msra.mxu0 0.0
        %537 = vmatpush.xpose.msra.mxu0 0.0
        %538 = vmatpush.xpose.msra.mxu0 0.0
        %539 = vmatpush.xpose.msra.mxu0 0.0
        %540 = vmatpush.xpose.msra.mxu0 0.0
        %541 = vmatpush.xpose.msra.mxu0 0.0
        %542 = vmatpush.xpose.msra.mxu0 0.0
        %v543 = vand.u32 %v248, 4294901760
        %v544 = vsub.f32 %v248, %v543
        %v545 = vand.u32 %v544, 4294901760
        %546 = vmatpush.xpose.msra.mxu0 %v545
        %v547 = vand.u32 %v244, 4294901760
        %v548 = vsub.f32 %v244, %v547
        %v549 = vand.u32 %v548, 4294901760
        %550 = vmatpush.xpose.msra.mxu0 %v549
        %v551 = vand.u32 %v254, 4294901760
        %552 = vmatmul.f32.gmra.mxu0 %v551
        %v553 = vpop.f32.mrf.mxu0
        %v554 = vadd.f32 %v527, %v553
        %555 = vdwg.mxu0
        %556 = vmatpush.xpose.msra.mxu0 0.0
        %557 = vmatpush.xpose.msra.mxu0 0.0
        %558 = vmatpush.xpose.msra.mxu0 0.0
        %559 = vmatpush.xpose.msra.mxu0 0.0
        %560 = vmatpush.xpose.msra.mxu0 0.0
        %561 = vmatpush.xpose.msra.mxu0 0.0
        %562 = vmatpush.xpose.msra.mxu0 0.0
        %563 = vmatpush.xpose.msra.mxu0 0.0
        %564 = vmatpush.xpose.msra.mxu0 0.0
        %565 = vmatpush.xpose.msra.mxu0 0.0
        %566 = vmatpush.xpose.msra.mxu0 0.0
        %567 = vmatpush.xpose.msra.mxu0 0.0
        %568 = vmatpush.xpose.msra.mxu0 0.0
        %569 = vmatpush.xpose.msra.mxu0 0.0
        %v570 = vand.u32 %v248, 4294901760
        %571 = vmatpush.xpose.msra.mxu0 %v570
        %v572 = vand.u32 %v244, 4294901760
        %573 = vmatpush.xpose.msra.mxu0 %v572
        %v574 = vand.u32 %v254, 4294901760
        %575 = vmatmul.f32.gmra.mxu0 %v574
        %v576 = vpop.f32.mrf.mxu0
        %v577 = vadd.f32 %v554, %v576
        %578 = vdwg.mxu0
        %579 = vmatpush.xpose.msra.mxu0 0.0
        %580 = vmatpush.xpose.msra.mxu0 0.0
        %581 = vmatpush.xpose.msra.mxu0 0.0
        %582 = vmatpush.xpose.msra.mxu0 0.0
        %583 = vmatpush.xpose.msra.mxu0 0.0
        %584 = vmatpush.xpose.msra.mxu0 0.0
        %585 = vmatpush.xpose.msra.mxu0 0.0
        %586 = vmatpush.xpose.msra.mxu0 0.0
        %587 = vmatpush.xpose.msra.mxu0 0.0
        %588 = vmatpush.xpose.msra.mxu0 0.0
        %589 = vmatpush.xpose.msra.mxu0 0.0
        %590 = vmatpush.xpose.msra.mxu0 0.0
        %591 = vmatpush.xpose.msra.mxu0 0.0
        %592 = vmatpush.xpose.msra.mxu0 0.0
        %v593 = vand.u32 %v249, 4294901760
        %594 = vmatpush.xpose.msra.mxu0 %v593
        %v595 = vand.u32 %v245, 4294901760
        %596 = vmatpush.xpose.msra.mxu0 %v595
        %v597 = vand.u32 %v255, 4294901760
        %v598 = vsub.f32 %v255, %v597
        %v599 = vand.u32 %v598, 4294901760
        %v600 = vsub.f32 %v598, %v599
        %v601 = vand.u32 %v600, 4294901760
        %602 = vmatmul.f32.gmra.mxu0 %v601
        %v603 = vpop.f32.mrf.mxu0
        %v604 = vadd.f32 %v577, %v603
        %605 = vdwg.mxu0
        %606 = vmatpush.xpose.msra.mxu0 0.0
        %607 = vmatpush.xpose.msra.mxu0 0.0
        %608 = vmatpush.xpose.msra.mxu0 0.0
        %609 = vmatpush.xpose.msra.mxu0 0.0
        %610 = vmatpush.xpose.msra.mxu0 0.0
        %611 = vmatpush.xpose.msra.mxu0 0.0
        %612 = vmatpush.xpose.msra.mxu0 0.0
        %613 = vmatpush.xpose.msra.mxu0 0.0
        %614 = vmatpush.xpose.msra.mxu0 0.0
        %615 = vmatpush.xpose.msra.mxu0 0.0
        %616 = vmatpush.xpose.msra.mxu0 0.0
        %617 = vmatpush.xpose.msra.mxu0 0.0
        %618 = vmatpush.xpose.msra.mxu0 0.0
        %619 = vmatpush.xpose.msra.mxu0 0.0
        %v620 = vand.u32 %v249, 4294901760
        %v621 = vsub.f32 %v249, %v620
        %v622 = vand.u32 %v621, 4294901760
        %v623 = vsub.f32 %v621, %v622
        %v624 = vand.u32 %v623, 4294901760
        %625 = vmatpush.xpose.msra.mxu0 %v624
        %v626 = vand.u32 %v245, 4294901760
        %v627 = vsub.f32 %v245, %v626
        %v628 = vand.u32 %v627, 4294901760
        %v629 = vsub.f32 %v627, %v628
        %v630 = vand.u32 %v629, 4294901760
        %631 = vmatpush.xpose.msra.mxu0 %v630
        %v632 = vand.u32 %v255, 4294901760
        %633 = vmatmul.f32.gmra.mxu0 %v632
        %v634 = vpop.f32.mrf.mxu0
        %v635 = vadd.f32 %v604, %v634
        %636 = vdwg.mxu0
        %637 = vmatpush.xpose.msra.mxu0 0.0
        %638 = vmatpush.xpose.msra.mxu0 0.0
        %639 = vmatpush.xpose.msra.mxu0 0.0
        %640 = vmatpush.xpose.msra.mxu0 0.0
        %641 = vmatpush.xpose.msra.mxu0 0.0
        %642 = vmatpush.xpose.msra.mxu0 0.0
        %643 = vmatpush.xpose.msra.mxu0 0.0
        %644 = vmatpush.xpose.msra.mxu0 0.0
        %645 = vmatpush.xpose.msra.mxu0 0.0
        %646 = vmatpush.xpose.msra.mxu0 0.0
        %647 = vmatpush.xpose.msra.mxu0 0.0
        %648 = vmatpush.xpose.msra.mxu0 0.0
        %649 = vmatpush.xpose.msra.mxu0 0.0
        %650 = vmatpush.xpose.msra.mxu0 0.0
        %v651 = vand.u32 %v249, 4294901760
        %v652 = vsub.f32 %v249, %v651
        %653 = vmatpush.xpose.msra.mxu0 %v652
        %v654 = vand.u32 %v245, 4294901760
        %v655 = vsub.f32 %v245, %v654
        %656 = vmatpush.xpose.msra.mxu0 %v655
        %v657 = vand.u32 %v255, 4294901760
        %v658 = vsub.f32 %v255, %v657
        %659 = vmatmul.f32.gmra.mxu0 %v658
        %v660 = vpop.f32.mrf.mxu0
        %v661 = vadd.f32 %v635, %v660
        %662 = vdwg.mxu0
        %663 = vmatpush.xpose.msra.mxu0 0.0
        %664 = vmatpush.xpose.msra.mxu0 0.0
        %665 = vmatpush.xpose.msra.mxu0 0.0
        %666 = vmatpush.xpose.msra.mxu0 0.0
        %667 = vmatpush.xpose.msra.mxu0 0.0
        %668 = vmatpush.xpose.msra.mxu0 0.0
        %669 = vmatpush.xpose.msra.mxu0 0.0
        %670 = vmatpush.xpose.msra.mxu0 0.0
        %671 = vmatpush.xpose.msra.mxu0 0.0
        %672 = vmatpush.xpose.msra.mxu0 0.0
        %673 = vmatpush.xpose.msra.mxu0 0.0
        %674 = vmatpush.xpose.msra.mxu0 0.0
        %675 = vmatpush.xpose.msra.mxu0 0.0
        %676 = vmatpush.xpose.msra.mxu0 0.0
        %v677 = vand.u32 %v249, 4294901760
        %678 = vmatpush.xpose.msra.mxu0 %v677
        %v679 = vand.u32 %v245, 4294901760
        %680 = vmatpush.xpose.msra.mxu0 %v679
        %v681 = vand.u32 %v255, 4294901760
        %v682 = vsub.f32 %v255, %v681
        %v683 = vand.u32 %v682, 4294901760
        %684 = vmatmul.f32.gmra.mxu0 %v683
        %v685 = vpop.f32.mrf.mxu0
        %v686 = vadd.f32 %v661, %v685
        %687 = vdwg.mxu0
        %688 = vmatpush.xpose.msra.mxu0 0.0
        %689 = vmatpush.xpose.msra.mxu0 0.0
        %690 = vmatpush.xpose.msra.mxu0 0.0
        %691 = vmatpush.xpose.msra.mxu0 0.0
        %692 = vmatpush.xpose.msra.mxu0 0.0
        %693 = vmatpush.xpose.msra.mxu0 0.0
        %694 = vmatpush.xpose.msra.mxu0 0.0
        %695 = vmatpush.xpose.msra.mxu0 0.0
        %696 = vmatpush.xpose.msra.mxu0 0.0
        %697 = vmatpush.xpose.msra.mxu0 0.0
        %698 = vmatpush.xpose.msra.mxu0 0.0
        %699 = vmatpush.xpose.msra.mxu0 0.0
        %700 = vmatpush.xpose.msra.mxu0 0.0
        %701 = vmatpush.xpose.msra.mxu0 0.0
        %v702 = vand.u32 %v249, 4294901760
        %v703 = vsub.f32 %v249, %v702
        %v704 = vand.u32 %v703, 4294901760
        %705 = vmatpush.xpose.msra.mxu0 %v704
        %v706 = vand.u32 %v245, 4294901760
        %v707 = vsub.f32 %v245, %v706
        %v708 = vand.u32 %v707, 4294901760
        %709 = vmatpush.xpose.msra.mxu0 %v708
        %v710 = vand.u32 %v255, 4294901760
        %711 = vmatmul.f32.gmra.mxu0 %v710
        %v712 = vpop.f32.mrf.mxu0
        %v713 = vadd.f32 %v686, %v712
        %714 = vdwg.mxu0
        %715 = vmatpush.xpose.msra.mxu0 0.0
        %716 = vmatpush.xpose.msra.mxu0 0.0
        %717 = vmatpush.xpose.msra.mxu0 0.0
        %718 = vmatpush.xpose.msra.mxu0 0.0
        %719 = vmatpush.xpose.msra.mxu0 0.0
        %720 = vmatpush.xpose.msra.mxu0 0.0
        %721 = vmatpush.xpose.msra.mxu0 0.0
        %722 = vmatpush.xpose.msra.mxu0 0.0
        %723 = vmatpush.xpose.msra.mxu0 0.0
        %724 = vmatpush.xpose.msra.mxu0 0.0
        %725 = vmatpush.xpose.msra.mxu0 0.0
        %726 = vmatpush.xpose.msra.mxu0 0.0
        %727 = vmatpush.xpose.msra.mxu0 0.0
        %728 = vmatpush.xpose.msra.mxu0 0.0
        %v729 = vand.u32 %v249, 4294901760
        %730 = vmatpush.xpose.msra.mxu0 %v729
        %v731 = vand.u32 %v245, 4294901760
        %732 = vmatpush.xpose.msra.mxu0 %v731
        %v733 = vand.u32 %v255, 4294901760
        %734 = vmatmul.f32.gmra.mxu0 %v733
        %v735 = vpop.f32.mrf.mxu0
        %v736 = vadd.f32 %v713, %v735
        %737 = vdwg.mxu0
        %738 = vmatpush.xpose.msra.mxu0 0.0
        %739 = vmatpush.xpose.msra.mxu0 0.0
        %740 = vmatpush.xpose.msra.mxu0 0.0
        %741 = vmatpush.xpose.msra.mxu0 0.0
        %742 = vmatpush.xpose.msra.mxu0 0.0
        %743 = vmatpush.xpose.msra.mxu0 0.0
        %744 = vmatpush.xpose.msra.mxu0 0.0
        %745 = vmatpush.xpose.msra.mxu0 0.0
        %746 = vmatpush.xpose.msra.mxu0 0.0
        %747 = vmatpush.xpose.msra.mxu0 0.0
        %748 = vmatpush.xpose.msra.mxu0 0.0
        %749 = vmatpush.xpose.msra.mxu0 0.0
        %750 = vmatpush.xpose.msra.mxu0 0.0
        %751 = vmatpush.xpose.msra.mxu0 0.0
        %v752 = vand.u32 %v250, 4294901760
        %753 = vmatpush.xpose.msra.mxu0 %v752
        %v754 = vand.u32 %v246, 4294901760
        %755 = vmatpush.xpose.msra.mxu0 %v754
        %v756 = vand.u32 %v256, 4294901760
        %v757 = vsub.f32 %v256, %v756
        %v758 = vand.u32 %v757, 4294901760
        %v759 = vsub.f32 %v757, %v758
        %v760 = vand.u32 %v759, 4294901760
        %761 = vmatmul.f32.gmra.mxu0 %v760
        %v762 = vpop.f32.mrf.mxu0
        %v763 = vadd.f32 %v736, %v762
        %764 = vdwg.mxu0
        %765 = vmatpush.xpose.msra.mxu0 0.0
        %766 = vmatpush.xpose.msra.mxu0 0.0
        %767 = vmatpush.xpose.msra.mxu0 0.0
        %768 = vmatpush.xpose.msra.mxu0 0.0
        %769 = vmatpush.xpose.msra.mxu0 0.0
        %770 = vmatpush.xpose.msra.mxu0 0.0
        %771 = vmatpush.xpose.msra.mxu0 0.0
        %772 = vmatpush.xpose.msra.mxu0 0.0
        %773 = vmatpush.xpose.msra.mxu0 0.0
        %774 = vmatpush.xpose.msra.mxu0 0.0
        %775 = vmatpush.xpose.msra.mxu0 0.0
        %776 = vmatpush.xpose.msra.mxu0 0.0
        %777 = vmatpush.xpose.msra.mxu0 0.0
        %778 = vmatpush.xpose.msra.mxu0 0.0
        %v779 = vand.u32 %v250, 4294901760
        %v780 = vsub.f32 %v250, %v779
        %v781 = vand.u32 %v780, 4294901760
        %v782 = vsub.f32 %v780, %v781
        %v783 = vand.u32 %v782, 4294901760
        %784 = vmatpush.xpose.msra.mxu0 %v783
        %v785 = vand.u32 %v246, 4294901760
        %v786 = vsub.f32 %v246, %v785
        %v787 = vand.u32 %v786, 4294901760
        %v788 = vsub.f32 %v786, %v787
        %v789 = vand.u32 %v788, 4294901760
        %790 = vmatpush.xpose.msra.mxu0 %v789
        %v791 = vand.u32 %v256, 4294901760
        %792 = vmatmul.f32.gmra.mxu0 %v791
        %v793 = vpop.f32.mrf.mxu0
        %v794 = vadd.f32 %v763, %v793
        %795 = vdwg.mxu0
        %796 = vmatpush.xpose.msra.mxu0 0.0
        %797 = vmatpush.xpose.msra.mxu0 0.0
        %798 = vmatpush.xpose.msra.mxu0 0.0
        %799 = vmatpush.xpose.msra.mxu0 0.0
        %800 = vmatpush.xpose.msra.mxu0 0.0
        %801 = vmatpush.xpose.msra.mxu0 0.0
        %802 = vmatpush.xpose.msra.mxu0 0.0
        %803 = vmatpush.xpose.msra.mxu0 0.0
        %804 = vmatpush.xpose.msra.mxu0 0.0
        %805 = vmatpush.xpose.msra.mxu0 0.0
        %806 = vmatpush.xpose.msra.mxu0 0.0
        %807 = vmatpush.xpose.msra.mxu0 0.0
        %808 = vmatpush.xpose.msra.mxu0 0.0
        %809 = vmatpush.xpose.msra.mxu0 0.0
        %v810 = vand.u32 %v250, 4294901760
        %v811 = vsub.f32 %v250, %v810
        %812 = vmatpush.xpose.msra.mxu0 %v811
        %v813 = vand.u32 %v246, 4294901760
        %v814 = vsub.f32 %v246, %v813
        %815 = vmatpush.xpose.msra.mxu0 %v814
        %v816 = vand.u32 %v256, 4294901760
        %v817 = vsub.f32 %v256, %v816
        %818 = vmatmul.f32.gmra.mxu0 %v817
        %v819 = vpop.f32.mrf.mxu0
        %v820 = vadd.f32 %v794, %v819
        %821 = vdwg.mxu0
        %822 = vmatpush.xpose.msra.mxu0 0.0
        %823 = vmatpush.xpose.msra.mxu0 0.0
        %824 = vmatpush.xpose.msra.mxu0 0.0
        %825 = vmatpush.xpose.msra.mxu0 0.0
        %826 = vmatpush.xpose.msra.mxu0 0.0
        %827 = vmatpush.xpose.msra.mxu0 0.0
        %828 = vmatpush.xpose.msra.mxu0 0.0
        %829 = vmatpush.xpose.msra.mxu0 0.0
        %830 = vmatpush.xpose.msra.mxu0 0.0
        %831 = vmatpush.xpose.msra.mxu0 0.0
        %832 = vmatpush.xpose.msra.mxu0 0.0
        %833 = vmatpush.xpose.msra.mxu0 0.0
        %834 = vmatpush.xpose.msra.mxu0 0.0
        %835 = vmatpush.xpose.msra.mxu0 0.0
        %v836 = vand.u32 %v250, 4294901760
        %837 = vmatpush.xpose.msra.mxu0 %v836
        %v838 = vand.u32 %v246, 4294901760
        %839 = vmatpush.xpose.msra.mxu0 %v838
        %v840 = vand.u32 %v256, 4294901760
        %v841 = vsub.f32 %v256, %v840
        %v842 = vand.u32 %v841, 4294901760
        %843 = vmatmul.f32.gmra.mxu0 %v842
        %v844 = vpop.f32.mrf.mxu0
        %v845 = vadd.f32 %v820, %v844
        %846 = vdwg.mxu0
        %847 = vmatpush.xpose.msra.mxu0 0.0
        %848 = vmatpush.xpose.msra.mxu0 0.0
        %849 = vmatpush.xpose.msra.mxu0 0.0
        %850 = vmatpush.xpose.msra.mxu0 0.0
        %851 = vmatpush.xpose.msra.mxu0 0.0
        %852 = vmatpush.xpose.msra.mxu0 0.0
        %853 = vmatpush.xpose.msra.mxu0 0.0
        %854 = vmatpush.xpose.msra.mxu0 0.0
        %855 = vmatpush.xpose.msra.mxu0 0.0
        %856 = vmatpush.xpose.msra.mxu0 0.0
        %857 = vmatpush.xpose.msra.mxu0 0.0
        %858 = vmatpush.xpose.msra.mxu0 0.0
        %859 = vmatpush.xpose.msra.mxu0 0.0
        %860 = vmatpush.xpose.msra.mxu0 0.0
        %v861 = vand.u32 %v250, 4294901760
        %v862 = vsub.f32 %v250, %v861
        %v863 = vand.u32 %v862, 4294901760
        %864 = vmatpush.xpose.msra.mxu0 %v863
        %v865 = vand.u32 %v246, 4294901760
        %v866 = vsub.f32 %v246, %v865
        %v867 = vand.u32 %v866, 4294901760
        %868 = vmatpush.xpose.msra.mxu0 %v867
        %v869 = vand.u32 %v256, 4294901760
        %870 = vmatmul.f32.gmra.mxu0 %v869
        %v871 = vpop.f32.mrf.mxu0
        %v872 = vadd.f32 %v845, %v871
        %873 = vdwg.mxu0
        %874 = vmatpush.xpose.msra.mxu0 0.0
        %875 = vmatpush.xpose.msra.mxu0 0.0
        %876 = vmatpush.xpose.msra.mxu0 0.0
        %877 = vmatpush.xpose.msra.mxu0 0.0
        %878 = vmatpush.xpose.msra.mxu0 0.0
        %879 = vmatpush.xpose.msra.mxu0 0.0
        %880 = vmatpush.xpose.msra.mxu0 0.0
        %881 = vmatpush.xpose.msra.mxu0 0.0
        %882 = vmatpush.xpose.msra.mxu0 0.0
        %883 = vmatpush.xpose.msra.mxu0 0.0
        %884 = vmatpush.xpose.msra.mxu0 0.0
        %885 = vmatpush.xpose.msra.mxu0 0.0
        %886 = vmatpush.xpose.msra.mxu0 0.0
        %887 = vmatpush.xpose.msra.mxu0 0.0
        %v888 = vand.u32 %v250, 4294901760
        %889 = vmatpush.xpose.msra.mxu0 %v888
        %v890 = vand.u32 %v246, 4294901760
        %891 = vmatpush.xpose.msra.mxu0 %v890
        %v892 = vand.u32 %v256, 4294901760
        %893 = vmatmul.f32.gmra.mxu0 %v892
        %v894 = vpop.f32.mrf.mxu0
        %v895 = vadd.f32 %v872, %v894
        %896 = vdwg.mxu0
        %v897 = vand.u32 2147483647, %v895
        %v898 = vmul.f32 %v895, %v897
        %v899 = vmul.f32 %v895, %v895
        %v900 = vadd.f32 %v899, 1.0
        %v901 = vrcp.pop %v900
        %v902 = vmul.f32 %v900, %v901
        %v903 = vsub.f32 1.0, %v902
        %v904 = vmul.f32 %v901, %v903
        %v905 = vadd.f32 %v901, %v904
        %vm906 = vweird.f32 %v900
        %vm907 = vweird.f32 %v901
        %vm908 = vmor %vm906, %vm907
        %v909 = vsel %vm908, %v901, %v905
        %v910 = vand.u32 2147483647, %v900
        %vm911 = vcmp.eq.f32.partialorder %v910, 8.507059e+37
        %v912 = vand.u32 %v900, 2147483648
        %v913 = vor.u32 1.1754944e-38, %v912
        %v914 = vsel %vm911, %v913, %v909
        %v915 = vmul.f32 %v898, %v914
        %vm916 = vcmask 123904
        %917 = vst.msk [vmem:[#allocation10] sm:$0x3] %vm916, %v915
        %p918 = scmp.lt.s32.totalorder %s19, 2
        // Predicated region
        $region41: #{tpu_custom_call.1} parent=23 // pred_check
          %p919 = pneg %p918
        $region42: #{tpu_custom_call.1} parent=23 // pred_check_branch
          %921 = sbr.rel (%p919) target = $region44
        $region43: #{tpu_custom_call.1} parent=23 // pred_region
          %922 = vxpose.xlu0.b32.start [1/16] %v915, 128
          %923 = vxpose.xlu0.b32.cont [2/16] 0.0, 128
          %924 = vxpose.xlu0.b32.cont [3/16] 0.0, 128
          %925 = vxpose.xlu0.b32.cont [4/16] 0.0, 128
          %926 = vxpose.xlu0.b32.cont [5/16] 0.0, 128
          %927 = vxpose.xlu0.b32.cont [6/16] 0.0, 128
          %928 = vxpose.xlu0.b32.cont [7/16] 0.0, 128
          %929 = vxpose.xlu0.b32.cont [8/16] 0.0, 128
          %930 = vxpose.xlu0.b32.cont [9/16] 0.0, 128
          %931 = vxpose.xlu0.b32.cont [10/16] 0.0, 128
          %932 = vxpose.xlu0.b32.cont [11/16] 0.0, 128
          %933 = vxpose.xlu0.b32.cont [12/16] 0.0, 128
          %934 = vxpose.xlu0.b32.cont [13/16] 0.0, 128
          %935 = vxpose.xlu0.b32.cont [14/16] 0.0, 128
          %936 = vxpose.xlu0.b32.cont [15/16] 0.0, 128
          %937 = vxpose.xlu0.b32.end [16/16] 0.0, 128
          %v938 = vpop.trf.xlu0
          %v939 = vpop.trf.xlu0
          %v940 = vpop.trf.xlu0
          %v941 = vpop.trf.xlu0
          %v942 = vpop.trf.xlu0
          %v943 = vpop.trf.xlu0
          %v944 = vpop.trf.xlu0
          %v945 = vpop.trf.xlu0
          %v946 = vpop.trf.xlu0
          %v947 = vpop.trf.xlu0
          %v948 = vpop.trf.xlu0
          %v949 = vpop.trf.xlu0
          %v950 = vpop.trf.xlu0
          %v951 = vpop.trf.xlu0
          %v952 = vpop.trf.xlu0
          %v953 = vpop.trf.xlu0
          %v954 = vld [vmem:[#allocation5] sm:$0xff]
          %v955 = vld [vmem:[#allocation5 + $0x8] sm:$0xff]
          %v956 = vld [vmem:[#allocation5 + $0x10] sm:$0xff]
          %v957 = vld [vmem:[#allocation5 + $0x18] sm:$0xff]
          %v958 = vld [vmem:[#allocation5 + $0x20] sm:$0xff]
          %v959 = vld [vmem:[#allocation5 + $0x28] sm:$0xff]
          %v960 = vld [vmem:[#allocation5 + $0x30] sm:$0xff]
          %v961 = vld [vmem:[#allocation5 + $0x38] sm:$0xff]
          %962 = vst [vmem:[#allocation1] ss:$4 sm:$0xff] %v242
          %v963 = vld.sshfl [vmem:[#allocation1] sm:$0xff pattern:$0x73625140]
          %v964 = vld.sshfl [vmem:[#allocation1 + $0x8] sm:$0xff pattern:$0x73625140]
          %v965 = vld.sshfl [vmem:[#allocation1 + $0x10] sm:$0xff pattern:$0x73625140]
          %v966 = vld.sshfl [vmem:[#allocation1 + $0x18] sm:$0xff pattern:$0x73625140]
          %vm967 = vcmask 15360
          %v969 = vsel %vm967, %v938, 0
          %v972 = vsel %vm967, %v939, 0
          %vm974 = vcmask 1041408
          %v975 = vsel %vm974, %v963, 0
          %v977 = vsel %vm974, %v964, 0
          %v979 = vsel %vm974, %v965, 0
          %v981 = vsel %vm974, %v966, 0
          %983 = vmatpush.msra.mxu0 0.0
          %984 = vmatpush.msra.mxu0 0.0
          %985 = vmatpush.msra.mxu0 0.0
          %986 = vmatpush.msra.mxu0 0.0
          %987 = vmatpush.msra.mxu0 0.0
          %988 = vmatpush.msra.mxu0 0.0
          %989 = vmatpush.msra.mxu0 0.0
          %990 = vmatpush.msra.mxu0 0.0
          %991 = vmatpush.msra.mxu0 0.0
          %992 = vmatpush.msra.mxu0 0.0
          %993 = vmatpush.msra.mxu0 0.0
          %994 = vmatpush.msra.mxu0 0.0
          %995 = vmatpush.msra.mxu0 0.0
          %996 = vmatpush.msra.mxu0 0.0
          %997 = vmatpush.msra.mxu0 0.0
          %v998 = vand.u32 %v975, 4294901760
          %999 = vmatpush.msra.mxu0 %v998
          %v1000 = vand.u32 %v969, 4294901760
          %v1001 = vsub.f32 %v969, %v1000
          %v1002 = vand.u32 %v1001, 4294901760
          %v1003 = vsub.f32 %v1001, %v1002
          %v1004 = vand.u32 %v1003, 4294901760
          %1005 = vmatmul.f32.gmra.mxu0 %v1004
          %v1006 = vpop.f32.mrf.mxu0
          %v1007 = vadd.f32 0.0, %v1006
          %v1008 = vand.u32 %v972, 4294901760
          %v1009 = vsub.f32 %v972, %v1008
          %v1010 = vand.u32 %v1009, 4294901760
          %v1011 = vsub.f32 %v1009, %v1010
          %v1012 = vand.u32 %v1011, 4294901760
          %1013 = vmatmul.f32.gmra.mxu0 %v1012
          %v1014 = vpop.f32.mrf.mxu0
          %v1015 = vadd.f32 0.0, %v1014
          %1016 = vdwg.mxu0
          %1017 = vmatpush.msra.mxu0 0.0
          %1018 = vmatpush.msra.mxu0 0.0
          %1019 = vmatpush.msra.mxu0 0.0
          %1020 = vmatpush.msra.mxu0 0.0
          %1021 = vmatpush.msra.mxu0 0.0
          %1022 = vmatpush.msra.mxu0 0.0
          %1023 = vmatpush.msra.mxu0 0.0
          %1024 = vmatpush.msra.mxu0 0.0
          %1025 = vmatpush.msra.mxu0 0.0
          %1026 = vmatpush.msra.mxu0 0.0
          %1027 = vmatpush.msra.mxu0 0.0
          %1028 = vmatpush.msra.mxu0 0.0
          %1029 = vmatpush.msra.mxu0 0.0
          %1030 = vmatpush.msra.mxu0 0.0
          %1031 = vmatpush.msra.mxu0 0.0
          %v1032 = vand.u32 %v975, 4294901760
          %v1033 = vsub.f32 %v975, %v1032
          %v1034 = vand.u32 %v1033, 4294901760
          %v1035 = vsub.f32 %v1033, %v1034
          %v1036 = vand.u32 %v1035, 4294901760
          %1037 = vmatpush.msra.mxu0 %v1036
          %v1038 = vand.u32 %v969, 4294901760
          %1039 = vmatmul.f32.gmra.mxu0 %v1038
          %v1040 = vpop.f32.mrf.mxu0
          %v1041 = vadd.f32 %v1007, %v1040
          %v1042 = vand.u32 %v972, 4294901760
          %1043 = vmatmul.f32.gmra.mxu0 %v1042
          %v1044 = vpop.f32.mrf.mxu0
          %v1045 = vadd.f32 %v1015, %v1044
          %1046 = vdwg.mxu0
          %1047 = vmatpush.msra.mxu0 0.0
          %1048 = vmatpush.msra.mxu0 0.0
          %1049 = vmatpush.msra.mxu0 0.0
          %1050 = vmatpush.msra.mxu0 0.0
          %1051 = vmatpush.msra.mxu0 0.0
          %1052 = vmatpush.msra.mxu0 0.0
          %1053 = vmatpush.msra.mxu0 0.0
          %1054 = vmatpush.msra.mxu0 0.0
          %1055 = vmatpush.msra.mxu0 0.0
          %1056 = vmatpush.msra.mxu0 0.0
          %1057 = vmatpush.msra.mxu0 0.0
          %1058 = vmatpush.msra.mxu0 0.0
          %1059 = vmatpush.msra.mxu0 0.0
          %1060 = vmatpush.msra.mxu0 0.0
          %1061 = vmatpush.msra.mxu0 0.0
          %v1062 = vand.u32 %v975, 4294901760
          %v1063 = vsub.f32 %v975, %v1062
          %1064 = vmatpush.msra.mxu0 %v1063
          %v1065 = vand.u32 %v969, 4294901760
          %v1066 = vsub.f32 %v969, %v1065
          %1067 = vmatmul.f32.gmra.mxu0 %v1066
          %v1068 = vpop.f32.mrf.mxu0
          %v1069 = vadd.f32 %v1041, %v1068
          %v1070 = vand.u32 %v972, 4294901760
          %v1071 = vsub.f32 %v972, %v1070
          %1072 = vmatmul.f32.gmra.mxu0 %v1071
          %v1073 = vpop.f32.mrf.mxu0
          %v1074 = vadd.f32 %v1045, %v1073
          %1075 = vdwg.mxu0
          %1076 = vmatpush.msra.mxu0 0.0
          %1077 = vmatpush.msra.mxu0 0.0
          %1078 = vmatpush.msra.mxu0 0.0
          %1079 = vmatpush.msra.mxu0 0.0
          %1080 = vmatpush.msra.mxu0 0.0
          %1081 = vmatpush.msra.mxu0 0.0
          %1082 = vmatpush.msra.mxu0 0.0
          %1083 = vmatpush.msra.mxu0 0.0
          %1084 = vmatpush.msra.mxu0 0.0
          %1085 = vmatpush.msra.mxu0 0.0
          %1086 = vmatpush.msra.mxu0 0.0
          %1087 = vmatpush.msra.mxu0 0.0
          %1088 = vmatpush.msra.mxu0 0.0
          %1089 = vmatpush.msra.mxu0 0.0
          %1090 = vmatpush.msra.mxu0 0.0
          %v1091 = vand.u32 %v975, 4294901760
          %1092 = vmatpush.msra.mxu0 %v1091
          %v1093 = vand.u32 %v969, 4294901760
          %v1094 = vsub.f32 %v969, %v1093
          %v1095 = vand.u32 %v1094, 4294901760
          %1096 = vmatmul.f32.gmra.mxu0 %v1095
          %v1097 = vpop.f32.mrf.mxu0
          %v1098 = vadd.f32 %v1069, %v1097
          %v1099 = vand.u32 %v972, 4294901760
          %v1100 = vsub.f32 %v972, %v1099
          %v1101 = vand.u32 %v1100, 4294901760
          %1102 = vmatmul.f32.gmra.mxu0 %v1101
          %v1103 = vpop.f32.mrf.mxu0
          %v1104 = vadd.f32 %v1074, %v1103
          %1105 = vdwg.mxu0
          %1106 = vmatpush.msra.mxu0 0.0
          %1107 = vmatpush.msra.mxu0 0.0
          %1108 = vmatpush.msra.mxu0 0.0
          %1109 = vmatpush.msra.mxu0 0.0
          %1110 = vmatpush.msra.mxu0 0.0
          %1111 = vmatpush.msra.mxu0 0.0
          %1112 = vmatpush.msra.mxu0 0.0
          %1113 = vmatpush.msra.mxu0 0.0
          %1114 = vmatpush.msra.mxu0 0.0
          %1115 = vmatpush.msra.mxu0 0.0
          %1116 = vmatpush.msra.mxu0 0.0
          %1117 = vmatpush.msra.mxu0 0.0
          %1118 = vmatpush.msra.mxu0 0.0
          %1119 = vmatpush.msra.mxu0 0.0
          %1120 = vmatpush.msra.mxu0 0.0
          %v1121 = vand.u32 %v975, 4294901760
          %v1122 = vsub.f32 %v975, %v1121
          %v1123 = vand.u32 %v1122, 4294901760
          %1124 = vmatpush.msra.mxu0 %v1123
          %v1125 = vand.u32 %v969, 4294901760
          %1126 = vmatmul.f32.gmra.mxu0 %v1125
          %v1127 = vpop.f32.mrf.mxu0
          %v1128 = vadd.f32 %v1098, %v1127
          %v1129 = vand.u32 %v972, 4294901760
          %1130 = vmatmul.f32.gmra.mxu0 %v1129
          %v1131 = vpop.f32.mrf.mxu0
          %v1132 = vadd.f32 %v1104, %v1131
          %1133 = vdwg.mxu0
          %1134 = vmatpush.msra.mxu0 0.0
          %1135 = vmatpush.msra.mxu0 0.0
          %1136 = vmatpush.msra.mxu0 0.0
          %1137 = vmatpush.msra.mxu0 0.0
          %1138 = vmatpush.msra.mxu0 0.0
          %1139 = vmatpush.msra.mxu0 0.0
          %1140 = vmatpush.msra.mxu0 0.0
          %1141 = vmatpush.msra.mxu0 0.0
          %1142 = vmatpush.msra.mxu0 0.0
          %1143 = vmatpush.msra.mxu0 0.0
          %1144 = vmatpush.msra.mxu0 0.0
          %1145 = vmatpush.msra.mxu0 0.0
          %1146 = vmatpush.msra.mxu0 0.0
          %1147 = vmatpush.msra.mxu0 0.0
          %1148 = vmatpush.msra.mxu0 0.0
          %v1149 = vand.u32 %v975, 4294901760
          %1150 = vmatpush.msra.mxu0 %v1149
          %v1151 = vand.u32 %v969, 4294901760
          %1152 = vmatmul.f32.gmra.mxu0 %v1151
          %v1153 = vpop.f32.mrf.mxu0
          %v1154 = vadd.f32 %v1128, %v1153
          %v1155 = vand.u32 %v972, 4294901760
          %1156 = vmatmul.f32.gmra.mxu0 %v1155
          %v1157 = vpop.f32.mrf.mxu0
          %v1158 = vadd.f32 %v1132, %v1157
          %1159 = vdwg.mxu0
          %1160 = vmatpush.msra.mxu0 0.0
          %1161 = vmatpush.msra.mxu0 0.0
          %1162 = vmatpush.msra.mxu0 0.0
          %1163 = vmatpush.msra.mxu0 0.0
          %1164 = vmatpush.msra.mxu0 0.0
          %1165 = vmatpush.msra.mxu0 0.0
          %1166 = vmatpush.msra.mxu0 0.0
          %1167 = vmatpush.msra.mxu0 0.0
          %1168 = vmatpush.msra.mxu0 0.0
          %1169 = vmatpush.msra.mxu0 0.0
          %1170 = vmatpush.msra.mxu0 0.0
          %1171 = vmatpush.msra.mxu0 0.0
          %1172 = vmatpush.msra.mxu0 0.0
          %1173 = vmatpush.msra.mxu0 0.0
          %1174 = vmatpush.msra.mxu0 0.0
          %v1175 = vand.u32 %v977, 4294901760
          %1176 = vmatpush.msra.mxu0 %v1175
          %v1177 = vand.u32 %v969, 4294901760
          %v1178 = vsub.f32 %v969, %v1177
          %v1179 = vand.u32 %v1178, 4294901760
          %v1180 = vsub.f32 %v1178, %v1179
          %v1181 = vand.u32 %v1180, 4294901760
          %1182 = vmatmul.f32.gmra.mxu0 %v1181
          %v1183 = vpop.f32.mrf.mxu0
          %v1184 = vadd.f32 0.0, %v1183
          %v1185 = vand.u32 %v972, 4294901760
          %v1186 = vsub.f32 %v972, %v1185
          %v1187 = vand.u32 %v1186, 4294901760
          %v1188 = vsub.f32 %v1186, %v1187
          %v1189 = vand.u32 %v1188, 4294901760
          %1190 = vmatmul.f32.gmra.mxu0 %v1189
          %v1191 = vpop.f32.mrf.mxu0
          %v1192 = vadd.f32 0.0, %v1191
          %1193 = vdwg.mxu0
          %1194 = vmatpush.msra.mxu0 0.0
          %1195 = vmatpush.msra.mxu0 0.0
          %1196 = vmatpush.msra.mxu0 0.0
          %1197 = vmatpush.msra.mxu0 0.0
          %1198 = vmatpush.msra.mxu0 0.0
          %1199 = vmatpush.msra.mxu0 0.0
          %1200 = vmatpush.msra.mxu0 0.0
          %1201 = vmatpush.msra.mxu0 0.0
          %1202 = vmatpush.msra.mxu0 0.0
          %1203 = vmatpush.msra.mxu0 0.0
          %1204 = vmatpush.msra.mxu0 0.0
          %1205 = vmatpush.msra.mxu0 0.0
          %1206 = vmatpush.msra.mxu0 0.0
          %1207 = vmatpush.msra.mxu0 0.0
          %1208 = vmatpush.msra.mxu0 0.0
          %v1209 = vand.u32 %v977, 4294901760
          %v1210 = vsub.f32 %v977, %v1209
          %v1211 = vand.u32 %v1210, 4294901760
          %v1212 = vsub.f32 %v1210, %v1211
          %v1213 = vand.u32 %v1212, 4294901760
          %1214 = vmatpush.msra.mxu0 %v1213
          %v1215 = vand.u32 %v969, 4294901760
          %1216 = vmatmul.f32.gmra.mxu0 %v1215
          %v1217 = vpop.f32.mrf.mxu0
          %v1218 = vadd.f32 %v1184, %v1217
          %v1219 = vand.u32 %v972, 4294901760
          %1220 = vmatmul.f32.gmra.mxu0 %v1219
          %v1221 = vpop.f32.mrf.mxu0
          %v1222 = vadd.f32 %v1192, %v1221
          %1223 = vdwg.mxu0
          %1224 = vmatpush.msra.mxu0 0.0
          %1225 = vmatpush.msra.mxu0 0.0
          %1226 = vmatpush.msra.mxu0 0.0
          %1227 = vmatpush.msra.mxu0 0.0
          %1228 = vmatpush.msra.mxu0 0.0
          %1229 = vmatpush.msra.mxu0 0.0
          %1230 = vmatpush.msra.mxu0 0.0
          %1231 = vmatpush.msra.mxu0 0.0
          %1232 = vmatpush.msra.mxu0 0.0
          %1233 = vmatpush.msra.mxu0 0.0
          %1234 = vmatpush.msra.mxu0 0.0
          %1235 = vmatpush.msra.mxu0 0.0
          %1236 = vmatpush.msra.mxu0 0.0
          %1237 = vmatpush.msra.mxu0 0.0
          %1238 = vmatpush.msra.mxu0 0.0
          %v1239 = vand.u32 %v977, 4294901760
          %v1240 = vsub.f32 %v977, %v1239
          %1241 = vmatpush.msra.mxu0 %v1240
          %v1242 = vand.u32 %v969, 4294901760
          %v1243 = vsub.f32 %v969, %v1242
          %1244 = vmatmul.f32.gmra.mxu0 %v1243
          %v1245 = vpop.f32.mrf.mxu0
          %v1246 = vadd.f32 %v1218, %v1245
          %v1247 = vand.u32 %v972, 4294901760
          %v1248 = vsub.f32 %v972, %v1247
          %1249 = vmatmul.f32.gmra.mxu0 %v1248
          %v1250 = vpop.f32.mrf.mxu0
          %v1251 = vadd.f32 %v1222, %v1250
          %1252 = vdwg.mxu0
          %1253 = vmatpush.msra.mxu0 0.0
          %1254 = vmatpush.msra.mxu0 0.0
          %1255 = vmatpush.msra.mxu0 0.0
          %1256 = vmatpush.msra.mxu0 0.0
          %1257 = vmatpush.msra.mxu0 0.0
          %1258 = vmatpush.msra.mxu0 0.0
          %1259 = vmatpush.msra.mxu0 0.0
          %1260 = vmatpush.msra.mxu0 0.0
          %1261 = vmatpush.msra.mxu0 0.0
          %1262 = vmatpush.msra.mxu0 0.0
          %1263 = vmatpush.msra.mxu0 0.0
          %1264 = vmatpush.msra.mxu0 0.0
          %1265 = vmatpush.msra.mxu0 0.0
          %1266 = vmatpush.msra.mxu0 0.0
          %1267 = vmatpush.msra.mxu0 0.0
          %v1268 = vand.u32 %v977, 4294901760
          %1269 = vmatpush.msra.mxu0 %v1268
          %v1270 = vand.u32 %v969, 4294901760
          %v1271 = vsub.f32 %v969, %v1270
          %v1272 = vand.u32 %v1271, 4294901760
          %1273 = vmatmul.f32.gmra.mxu0 %v1272
          %v1274 = vpop.f32.mrf.mxu0
          %v1275 = vadd.f32 %v1246, %v1274
          %v1276 = vand.u32 %v972, 4294901760
          %v1277 = vsub.f32 %v972, %v1276
          %v1278 = vand.u32 %v1277, 4294901760
          %1279 = vmatmul.f32.gmra.mxu0 %v1278
          %v1280 = vpop.f32.mrf.mxu0
          %v1281 = vadd.f32 %v1251, %v1280
          %1282 = vdwg.mxu0
          %1283 = vmatpush.msra.mxu0 0.0
          %1284 = vmatpush.msra.mxu0 0.0
          %1285 = vmatpush.msra.mxu0 0.0
          %1286 = vmatpush.msra.mxu0 0.0
          %1287 = vmatpush.msra.mxu0 0.0
          %1288 = vmatpush.msra.mxu0 0.0
          %1289 = vmatpush.msra.mxu0 0.0
          %1290 = vmatpush.msra.mxu0 0.0
          %1291 = vmatpush.msra.mxu0 0.0
          %1292 = vmatpush.msra.mxu0 0.0
          %1293 = vmatpush.msra.mxu0 0.0
          %1294 = vmatpush.msra.mxu0 0.0
          %1295 = vmatpush.msra.mxu0 0.0
          %1296 = vmatpush.msra.mxu0 0.0
          %1297 = vmatpush.msra.mxu0 0.0
          %v1298 = vand.u32 %v977, 4294901760
          %v1299 = vsub.f32 %v977, %v1298
          %v1300 = vand.u32 %v1299, 4294901760
          %1301 = vmatpush.msra.mxu0 %v1300
          %v1302 = vand.u32 %v969, 4294901760
          %1303 = vmatmul.f32.gmra.mxu0 %v1302
          %v1304 = vpop.f32.mrf.mxu0
          %v1305 = vadd.f32 %v1275, %v1304
          %v1306 = vand.u32 %v972, 4294901760
          %1307 = vmatmul.f32.gmra.mxu0 %v1306
          %v1308 = vpop.f32.mrf.mxu0
          %v1309 = vadd.f32 %v1281, %v1308
          %1310 = vdwg.mxu0
          %1311 = vmatpush.msra.mxu0 0.0
          %1312 = vmatpush.msra.mxu0 0.0
          %1313 = vmatpush.msra.mxu0 0.0
          %1314 = vmatpush.msra.mxu0 0.0
          %1315 = vmatpush.msra.mxu0 0.0
          %1316 = vmatpush.msra.mxu0 0.0
          %1317 = vmatpush.msra.mxu0 0.0
          %1318 = vmatpush.msra.mxu0 0.0
          %1319 = vmatpush.msra.mxu0 0.0
          %1320 = vmatpush.msra.mxu0 0.0
          %1321 = vmatpush.msra.mxu0 0.0
          %1322 = vmatpush.msra.mxu0 0.0
          %1323 = vmatpush.msra.mxu0 0.0
          %1324 = vmatpush.msra.mxu0 0.0
          %1325 = vmatpush.msra.mxu0 0.0
          %v1326 = vand.u32 %v977, 4294901760
          %1327 = vmatpush.msra.mxu0 %v1326
          %v1328 = vand.u32 %v969, 4294901760
          %1329 = vmatmul.f32.gmra.mxu0 %v1328
          %v1330 = vpop.f32.mrf.mxu0
          %v1331 = vadd.f32 %v1305, %v1330
          %v1332 = vand.u32 %v972, 4294901760
          %1333 = vmatmul.f32.gmra.mxu0 %v1332
          %v1334 = vpop.f32.mrf.mxu0
          %v1335 = vadd.f32 %v1309, %v1334
          %1336 = vdwg.mxu0
          %1337 = vmatpush.msra.mxu0 0.0
          %1338 = vmatpush.msra.mxu0 0.0
          %1339 = vmatpush.msra.mxu0 0.0
          %1340 = vmatpush.msra.mxu0 0.0
          %1341 = vmatpush.msra.mxu0 0.0
          %1342 = vmatpush.msra.mxu0 0.0
          %1343 = vmatpush.msra.mxu0 0.0
          %1344 = vmatpush.msra.mxu0 0.0
          %1345 = vmatpush.msra.mxu0 0.0
          %1346 = vmatpush.msra.mxu0 0.0
          %1347 = vmatpush.msra.mxu0 0.0
          %1348 = vmatpush.msra.mxu0 0.0
          %1349 = vmatpush.msra.mxu0 0.0
          %1350 = vmatpush.msra.mxu0 0.0
          %1351 = vmatpush.msra.mxu0 0.0
          %v1352 = vand.u32 %v979, 4294901760
          %1353 = vmatpush.msra.mxu0 %v1352
          %v1354 = vand.u32 %v969, 4294901760
          %v1355 = vsub.f32 %v969, %v1354
          %v1356 = vand.u32 %v1355, 4294901760
          %v1357 = vsub.f32 %v1355, %v1356
          %v1358 = vand.u32 %v1357, 4294901760
          %1359 = vmatmul.f32.gmra.mxu0 %v1358
          %v1360 = vpop.f32.mrf.mxu0
          %v1361 = vadd.f32 0.0, %v1360
          %v1362 = vand.u32 %v972, 4294901760
          %v1363 = vsub.f32 %v972, %v1362
          %v1364 = vand.u32 %v1363, 4294901760
          %v1365 = vsub.f32 %v1363, %v1364
          %v1366 = vand.u32 %v1365, 4294901760
          %1367 = vmatmul.f32.gmra.mxu0 %v1366
          %v1368 = vpop.f32.mrf.mxu0
          %v1369 = vadd.f32 0.0, %v1368
          %1370 = vdwg.mxu0
          %1371 = vmatpush.msra.mxu0 0.0
          %1372 = vmatpush.msra.mxu0 0.0
          %1373 = vmatpush.msra.mxu0 0.0
          %1374 = vmatpush.msra.mxu0 0.0
          %1375 = vmatpush.msra.mxu0 0.0
          %1376 = vmatpush.msra.mxu0 0.0
          %1377 = vmatpush.msra.mxu0 0.0
          %1378 = vmatpush.msra.mxu0 0.0
          %1379 = vmatpush.msra.mxu0 0.0
          %1380 = vmatpush.msra.mxu0 0.0
          %1381 = vmatpush.msra.mxu0 0.0
          %1382 = vmatpush.msra.mxu0 0.0
          %1383 = vmatpush.msra.mxu0 0.0
          %1384 = vmatpush.msra.mxu0 0.0
          %1385 = vmatpush.msra.mxu0 0.0
          %v1386 = vand.u32 %v979, 4294901760
          %v1387 = vsub.f32 %v979, %v1386
          %v1388 = vand.u32 %v1387, 4294901760
          %v1389 = vsub.f32 %v1387, %v1388
          %v1390 = vand.u32 %v1389, 4294901760
          %1391 = vmatpush.msra.mxu0 %v1390
          %v1392 = vand.u32 %v969, 4294901760
          %1393 = vmatmul.f32.gmra.mxu0 %v1392
          %v1394 = vpop.f32.mrf.mxu0
          %v1395 = vadd.f32 %v1361, %v1394
          %v1396 = vand.u32 %v972, 4294901760
          %1397 = vmatmul.f32.gmra.mxu0 %v1396
          %v1398 = vpop.f32.mrf.mxu0
          %v1399 = vadd.f32 %v1369, %v1398
          %1400 = vdwg.mxu0
          %1401 = vmatpush.msra.mxu0 0.0
          %1402 = vmatpush.msra.mxu0 0.0
          %1403 = vmatpush.msra.mxu0 0.0
          %1404 = vmatpush.msra.mxu0 0.0
          %1405 = vmatpush.msra.mxu0 0.0
          %1406 = vmatpush.msra.mxu0 0.0
          %1407 = vmatpush.msra.mxu0 0.0
          %1408 = vmatpush.msra.mxu0 0.0
          %1409 = vmatpush.msra.mxu0 0.0
          %1410 = vmatpush.msra.mxu0 0.0
          %1411 = vmatpush.msra.mxu0 0.0
          %1412 = vmatpush.msra.mxu0 0.0
          %1413 = vmatpush.msra.mxu0 0.0
          %1414 = vmatpush.msra.mxu0 0.0
          %1415 = vmatpush.msra.mxu0 0.0
          %v1416 = vand.u32 %v979, 4294901760
          %v1417 = vsub.f32 %v979, %v1416
          %1418 = vmatpush.msra.mxu0 %v1417
          %v1419 = vand.u32 %v969, 4294901760
          %v1420 = vsub.f32 %v969, %v1419
          %1421 = vmatmul.f32.gmra.mxu0 %v1420
          %v1422 = vpop.f32.mrf.mxu0
          %v1423 = vadd.f32 %v1395, %v1422
          %v1424 = vand.u32 %v972, 4294901760
          %v1425 = vsub.f32 %v972, %v1424
          %1426 = vmatmul.f32.gmra.mxu0 %v1425
          %v1427 = vpop.f32.mrf.mxu0
          %v1428 = vadd.f32 %v1399, %v1427
          %1429 = vdwg.mxu0
          %1430 = vmatpush.msra.mxu0 0.0
          %1431 = vmatpush.msra.mxu0 0.0
          %1432 = vmatpush.msra.mxu0 0.0
          %1433 = vmatpush.msra.mxu0 0.0
          %1434 = vmatpush.msra.mxu0 0.0
          %1435 = vmatpush.msra.mxu0 0.0
          %1436 = vmatpush.msra.mxu0 0.0
          %1437 = vmatpush.msra.mxu0 0.0
          %1438 = vmatpush.msra.mxu0 0.0
          %1439 = vmatpush.msra.mxu0 0.0
          %1440 = vmatpush.msra.mxu0 0.0
          %1441 = vmatpush.msra.mxu0 0.0
          %1442 = vmatpush.msra.mxu0 0.0
          %1443 = vmatpush.msra.mxu0 0.0
          %1444 = vmatpush.msra.mxu0 0.0
          %v1445 = vand.u32 %v979, 4294901760
          %1446 = vmatpush.msra.mxu0 %v1445
          %v1447 = vand.u32 %v969, 4294901760
          %v1448 = vsub.f32 %v969, %v1447
          %v1449 = vand.u32 %v1448, 4294901760
          %1450 = vmatmul.f32.gmra.mxu0 %v1449
          %v1451 = vpop.f32.mrf.mxu0
          %v1452 = vadd.f32 %v1423, %v1451
          %v1453 = vand.u32 %v972, 4294901760
          %v1454 = vsub.f32 %v972, %v1453
          %v1455 = vand.u32 %v1454, 4294901760
          %1456 = vmatmul.f32.gmra.mxu0 %v1455
          %v1457 = vpop.f32.mrf.mxu0
          %v1458 = vadd.f32 %v1428, %v1457
          %1459 = vdwg.mxu0
          %1460 = vmatpush.msra.mxu0 0.0
          %1461 = vmatpush.msra.mxu0 0.0
          %1462 = vmatpush.msra.mxu0 0.0
          %1463 = vmatpush.msra.mxu0 0.0
          %1464 = vmatpush.msra.mxu0 0.0
          %1465 = vmatpush.msra.mxu0 0.0
          %1466 = vmatpush.msra.mxu0 0.0
          %1467 = vmatpush.msra.mxu0 0.0
          %1468 = vmatpush.msra.mxu0 0.0
          %1469 = vmatpush.msra.mxu0 0.0
          %1470 = vmatpush.msra.mxu0 0.0
          %1471 = vmatpush.msra.mxu0 0.0
          %1472 = vmatpush.msra.mxu0 0.0
          %1473 = vmatpush.msra.mxu0 0.0
          %1474 = vmatpush.msra.mxu0 0.0
          %v1475 = vand.u32 %v979, 4294901760
          %v1476 = vsub.f32 %v979, %v1475
          %v1477 = vand.u32 %v1476, 4294901760
          %1478 = vmatpush.msra.mxu0 %v1477
          %v1479 = vand.u32 %v969, 4294901760
          %1480 = vmatmul.f32.gmra.mxu0 %v1479
          %v1481 = vpop.f32.mrf.mxu0
          %v1482 = vadd.f32 %v1452, %v1481
          %v1483 = vand.u32 %v972, 4294901760
          %1484 = vmatmul.f32.gmra.mxu0 %v1483
          %v1485 = vpop.f32.mrf.mxu0
          %v1486 = vadd.f32 %v1458, %v1485
          %1487 = vdwg.mxu0
          %1488 = vmatpush.msra.mxu0 0.0
          %1489 = vmatpush.msra.mxu0 0.0
          %1490 = vmatpush.msra.mxu0 0.0
          %1491 = vmatpush.msra.mxu0 0.0
          %1492 = vmatpush.msra.mxu0 0.0
          %1493 = vmatpush.msra.mxu0 0.0
          %1494 = vmatpush.msra.mxu0 0.0
          %1495 = vmatpush.msra.mxu0 0.0
          %1496 = vmatpush.msra.mxu0 0.0
          %1497 = vmatpush.msra.mxu0 0.0
          %1498 = vmatpush.msra.mxu0 0.0
          %1499 = vmatpush.msra.mxu0 0.0
          %1500 = vmatpush.msra.mxu0 0.0
          %1501 = vmatpush.msra.mxu0 0.0
          %1502 = vmatpush.msra.mxu0 0.0
          %v1503 = vand.u32 %v979, 4294901760
          %1504 = vmatpush.msra.mxu0 %v1503
          %v1505 = vand.u32 %v969, 4294901760
          %1506 = vmatmul.f32.gmra.mxu0 %v1505
          %v1507 = vpop.f32.mrf.mxu0
          %v1508 = vadd.f32 %v1482, %v1507
          %v1509 = vand.u32 %v972, 4294901760
          %1510 = vmatmul.f32.gmra.mxu0 %v1509
          %v1511 = vpop.f32.mrf.mxu0
          %v1512 = vadd.f32 %v1486, %v1511
          %1513 = vdwg.mxu0
          %1514 = vmatpush.msra.mxu0 0.0
          %1515 = vmatpush.msra.mxu0 0.0
          %1516 = vmatpush.msra.mxu0 0.0
          %1517 = vmatpush.msra.mxu0 0.0
          %1518 = vmatpush.msra.mxu0 0.0
          %1519 = vmatpush.msra.mxu0 0.0
          %1520 = vmatpush.msra.mxu0 0.0
          %1521 = vmatpush.msra.mxu0 0.0
          %1522 = vmatpush.msra.mxu0 0.0
          %1523 = vmatpush.msra.mxu0 0.0
          %1524 = vmatpush.msra.mxu0 0.0
          %1525 = vmatpush.msra.mxu0 0.0
          %1526 = vmatpush.msra.mxu0 0.0
          %1527 = vmatpush.msra.mxu0 0.0
          %1528 = vmatpush.msra.mxu0 0.0
          %v1529 = vand.u32 %v981, 4294901760
          %1530 = vmatpush.msra.mxu0 %v1529
          %v1531 = vand.u32 %v969, 4294901760
          %v1532 = vsub.f32 %v969, %v1531
          %v1533 = vand.u32 %v1532, 4294901760
          %v1534 = vsub.f32 %v1532, %v1533
          %v1535 = vand.u32 %v1534, 4294901760
          %1536 = vmatmul.f32.gmra.mxu0 %v1535
          %v1537 = vpop.f32.mrf.mxu0
          %v1538 = vadd.f32 0.0, %v1537
          %v1539 = vand.u32 %v972, 4294901760
          %v1540 = vsub.f32 %v972, %v1539
          %v1541 = vand.u32 %v1540, 4294901760
          %v1542 = vsub.f32 %v1540, %v1541
          %v1543 = vand.u32 %v1542, 4294901760
          %1544 = vmatmul.f32.gmra.mxu0 %v1543
          %v1545 = vpop.f32.mrf.mxu0
          %v1546 = vadd.f32 0.0, %v1545
          %1547 = vdwg.mxu0
          %1548 = vmatpush.msra.mxu0 0.0
          %1549 = vmatpush.msra.mxu0 0.0
          %1550 = vmatpush.msra.mxu0 0.0
          %1551 = vmatpush.msra.mxu0 0.0
          %1552 = vmatpush.msra.mxu0 0.0
          %1553 = vmatpush.msra.mxu0 0.0
          %1554 = vmatpush.msra.mxu0 0.0
          %1555 = vmatpush.msra.mxu0 0.0
          %1556 = vmatpush.msra.mxu0 0.0
          %1557 = vmatpush.msra.mxu0 0.0
          %1558 = vmatpush.msra.mxu0 0.0
          %1559 = vmatpush.msra.mxu0 0.0
          %1560 = vmatpush.msra.mxu0 0.0
          %1561 = vmatpush.msra.mxu0 0.0
          %1562 = vmatpush.msra.mxu0 0.0
          %v1563 = vand.u32 %v981, 4294901760
          %v1564 = vsub.f32 %v981, %v1563
          %v1565 = vand.u32 %v1564, 4294901760
          %v1566 = vsub.f32 %v1564, %v1565
          %v1567 = vand.u32 %v1566, 4294901760
          %1568 = vmatpush.msra.mxu0 %v1567
          %v1569 = vand.u32 %v969, 4294901760
          %1570 = vmatmul.f32.gmra.mxu0 %v1569
          %v1571 = vpop.f32.mrf.mxu0
          %v1572 = vadd.f32 %v1538, %v1571
          %v1573 = vand.u32 %v972, 4294901760
          %1574 = vmatmul.f32.gmra.mxu0 %v1573
          %v1575 = vpop.f32.mrf.mxu0
          %v1576 = vadd.f32 %v1546, %v1575
          %1577 = vdwg.mxu0
          %1578 = vmatpush.msra.mxu0 0.0
          %1579 = vmatpush.msra.mxu0 0.0
          %1580 = vmatpush.msra.mxu0 0.0
          %1581 = vmatpush.msra.mxu0 0.0
          %1582 = vmatpush.msra.mxu0 0.0
          %1583 = vmatpush.msra.mxu0 0.0
          %1584 = vmatpush.msra.mxu0 0.0
          %1585 = vmatpush.msra.mxu0 0.0
          %1586 = vmatpush.msra.mxu0 0.0
          %1587 = vmatpush.msra.mxu0 0.0
          %1588 = vmatpush.msra.mxu0 0.0
          %1589 = vmatpush.msra.mxu0 0.0
          %1590 = vmatpush.msra.mxu0 0.0
          %1591 = vmatpush.msra.mxu0 0.0
          %1592 = vmatpush.msra.mxu0 0.0
          %v1593 = vand.u32 %v981, 4294901760
          %v1594 = vsub.f32 %v981, %v1593
          %1595 = vmatpush.msra.mxu0 %v1594
          %v1596 = vand.u32 %v969, 4294901760
          %v1597 = vsub.f32 %v969, %v1596
          %1598 = vmatmul.f32.gmra.mxu0 %v1597
          %v1599 = vpop.f32.mrf.mxu0
          %v1600 = vadd.f32 %v1572, %v1599
          %v1601 = vand.u32 %v972, 4294901760
          %v1602 = vsub.f32 %v972, %v1601
          %1603 = vmatmul.f32.gmra.mxu0 %v1602
          %v1604 = vpop.f32.mrf.mxu0
          %v1605 = vadd.f32 %v1576, %v1604
          %1606 = vdwg.mxu0
          %1607 = vmatpush.msra.mxu0 0.0
          %1608 = vmatpush.msra.mxu0 0.0
          %1609 = vmatpush.msra.mxu0 0.0
          %1610 = vmatpush.msra.mxu0 0.0
          %1611 = vmatpush.msra.mxu0 0.0
          %1612 = vmatpush.msra.mxu0 0.0
          %1613 = vmatpush.msra.mxu0 0.0
          %1614 = vmatpush.msra.mxu0 0.0
          %1615 = vmatpush.msra.mxu0 0.0
          %1616 = vmatpush.msra.mxu0 0.0
          %1617 = vmatpush.msra.mxu0 0.0
          %1618 = vmatpush.msra.mxu0 0.0
          %1619 = vmatpush.msra.mxu0 0.0
          %1620 = vmatpush.msra.mxu0 0.0
          %1621 = vmatpush.msra.mxu0 0.0
          %v1622 = vand.u32 %v981, 4294901760
          %1623 = vmatpush.msra.mxu0 %v1622
          %v1624 = vand.u32 %v969, 4294901760
          %v1625 = vsub.f32 %v969, %v1624
          %v1626 = vand.u32 %v1625, 4294901760
          %1627 = vmatmul.f32.gmra.mxu0 %v1626
          %v1628 = vpop.f32.mrf.mxu0
          %v1629 = vadd.f32 %v1600, %v1628
          %v1630 = vand.u32 %v972, 4294901760
          %v1631 = vsub.f32 %v972, %v1630
          %v1632 = vand.u32 %v1631, 4294901760
          %1633 = vmatmul.f32.gmra.mxu0 %v1632
          %v1634 = vpop.f32.mrf.mxu0
          %v1635 = vadd.f32 %v1605, %v1634
          %1636 = vdwg.mxu0
          %1637 = vmatpush.msra.mxu0 0.0
          %1638 = vmatpush.msra.mxu0 0.0
          %1639 = vmatpush.msra.mxu0 0.0
          %1640 = vmatpush.msra.mxu0 0.0
          %1641 = vmatpush.msra.mxu0 0.0
          %1642 = vmatpush.msra.mxu0 0.0
          %1643 = vmatpush.msra.mxu0 0.0
          %1644 = vmatpush.msra.mxu0 0.0
          %1645 = vmatpush.msra.mxu0 0.0
          %1646 = vmatpush.msra.mxu0 0.0
          %1647 = vmatpush.msra.mxu0 0.0
          %1648 = vmatpush.msra.mxu0 0.0
          %1649 = vmatpush.msra.mxu0 0.0
          %1650 = vmatpush.msra.mxu0 0.0
          %1651 = vmatpush.msra.mxu0 0.0
          %v1652 = vand.u32 %v981, 4294901760
          %v1653 = vsub.f32 %v981, %v1652
          %v1654 = vand.u32 %v1653, 4294901760
          %1655 = vmatpush.msra.mxu0 %v1654
          %v1656 = vand.u32 %v969, 4294901760
          %1657 = vmatmul.f32.gmra.mxu0 %v1656
          %v1658 = vpop.f32.mrf.mxu0
          %v1659 = vadd.f32 %v1629, %v1658
          %v1660 = vand.u32 %v972, 4294901760
          %1661 = vmatmul.f32.gmra.mxu0 %v1660
          %v1662 = vpop.f32.mrf.mxu0
          %v1663 = vadd.f32 %v1635, %v1662
          %1664 = vdwg.mxu0
          %1665 = vmatpush.msra.mxu0 0.0
          %1666 = vmatpush.msra.mxu0 0.0
          %1667 = vmatpush.msra.mxu0 0.0
          %1668 = vmatpush.msra.mxu0 0.0
          %1669 = vmatpush.msra.mxu0 0.0
          %1670 = vmatpush.msra.mxu0 0.0
          %1671 = vmatpush.msra.mxu0 0.0
          %1672 = vmatpush.msra.mxu0 0.0
          %1673 = vmatpush.msra.mxu0 0.0
          %1674 = vmatpush.msra.mxu0 0.0
          %1675 = vmatpush.msra.mxu0 0.0
          %1676 = vmatpush.msra.mxu0 0.0
          %1677 = vmatpush.msra.mxu0 0.0
          %1678 = vmatpush.msra.mxu0 0.0
          %1679 = vmatpush.msra.mxu0 0.0
          %v1680 = vand.u32 %v981, 4294901760
          %1681 = vmatpush.msra.mxu0 %v1680
          %v1682 = vand.u32 %v969, 4294901760
          %1683 = vmatmul.f32.gmra.mxu0 %v1682
          %v1684 = vpop.f32.mrf.mxu0
          %v1685 = vadd.f32 %v1659, %v1684
          %v1686 = vand.u32 %v972, 4294901760
          %1687 = vmatmul.f32.gmra.mxu0 %v1686
          %v1688 = vpop.f32.mrf.mxu0
          %v1689 = vadd.f32 %v1663, %v1688
          %1690 = vdwg.mxu0
          %v1691 = vadd.f32 %v954, %v1154
          %v1692 = vadd.f32 %v955, %v1331
          %v1693 = vadd.f32 %v956, %v1508
          %v1694 = vadd.f32 %v957, %v1685
          %v1695 = vadd.f32 %v958, %v1158
          %v1696 = vadd.f32 %v959, %v1335
          %v1697 = vadd.f32 %v960, %v1512
          %v1698 = vadd.f32 %v961, %v1689
          %1699 = vst [vmem:[#allocation5] sm:$0xff] %v1691
          %1700 = vst [vmem:[#allocation5 + $0x8] sm:$0xff] %v1692
          %1701 = vst [vmem:[#allocation5 + $0x10] sm:$0xff] %v1693
          %1702 = vst [vmem:[#allocation5 + $0x18] sm:$0xff] %v1694
          %1703 = vst [vmem:[#allocation5 + $0x20] sm:$0xff] %v1695
          %1704 = vst [vmem:[#allocation5 + $0x28] sm:$0xff] %v1696
          %1705 = vst [vmem:[#allocation5 + $0x30] sm:$0xff] %v1697
          %1706 = vst [vmem:[#allocation5 + $0x38] sm:$0xff] %v1698
        $region44: #{tpu_custom_call.1} parent=23 // pred_fallthru
          _
        %p1707 = pnand %p125, %p918
        %p1708 = pneg %p1707
        // Predicated region
        $region45: #{tpu_custom_call.1} parent=23 // pred_check
          _
        $region46: #{tpu_custom_call.1} parent=23 // pred_check_branch
          %1710 = sbr.rel (%p1707) target = $region48
        $region47: #{tpu_custom_call.1} parent=23 // pred_region
          %v1711 = vld [vmem:[#allocation2] sm:$0xff]
          %v1712 = vld [vmem:[#allocation2 + $0x8] sm:$0xff]
          %v1713 = vld [vmem:[#allocation2 + $0x10] sm:$0xff]
          %v1714 = vld [vmem:[#allocation2 + $0x18] sm:$0xff]
          %v1715 = vld [vmem:[#allocation2 + $0x20] sm:$0xff]
          %v1716 = vld [vmem:[#allocation2 + $0x28] sm:$0xff]
          %v1717 = vld [vmem:[#allocation2 + $0x30] sm:$0xff]
          %v1718 = vld [vmem:[#allocation2 + $0x38] sm:$0xff]
          %v1719 = vld [vmem:[#allocation5] sm:$0xff]
          %v1720 = vld [vmem:[#allocation5 + $0x8] sm:$0xff]
          %v1721 = vld [vmem:[#allocation5 + $0x10] sm:$0xff]
          %v1722 = vld [vmem:[#allocation5 + $0x18] sm:$0xff]
          %v1723 = vld [vmem:[#allocation5 + $0x20] sm:$0xff]
          %v1724 = vld [vmem:[#allocation5 + $0x28] sm:$0xff]
          %v1725 = vld [vmem:[#allocation5 + $0x30] sm:$0xff]
          %v1726 = vld [vmem:[#allocation5 + $0x38] sm:$0xff]
          %v1727 = vmul.f32 %v1711, %v1719
          %v1728 = vmul.f32 %v1712, %v1720
          %v1729 = vmul.f32 %v1713, %v1721
          %v1730 = vmul.f32 %v1714, %v1722
          %v1731 = vmul.f32 %v1715, %v1723
          %v1732 = vmul.f32 %v1716, %v1724
          %v1733 = vmul.f32 %v1717, %v1725
          %v1734 = vmul.f32 %v1718, %v1726
          %1737 = vrot.lane.b32.xlu0 %v1727, 64
          %v1738 = vpop.permute.xlu0 %1737
          %1739 = vrot.lane.b32.xlu0 %v1731, 64
          %v1740 = vpop.permute.xlu0 %1739
          %v1743 = vadd.f32 %v1727, %v1738
          %v1744 = vadd.f32 %v1731, %v1740
          %v1745 = vadd.f32 %v1743, %v1728
          %v1746 = vadd.f32 %v1744, %v1732
          %1749 = vrot.lane.b32.xlu0 %v1728, 64
          %v1750 = vpop.permute.xlu0 %1749
          %1751 = vrot.lane.b32.xlu0 %v1732, 64
          %v1752 = vpop.permute.xlu0 %1751
          %v1755 = vadd.f32 %v1745, %v1750
          %v1756 = vadd.f32 %v1746, %v1752
          %v1757 = vadd.f32 %v1755, %v1729
          %v1758 = vadd.f32 %v1756, %v1733
          %1761 = vrot.lane.b32.xlu0 %v1729, 64
          %v1762 = vpop.permute.xlu0 %1761
          %1763 = vrot.lane.b32.xlu0 %v1733, 64
          %v1764 = vpop.permute.xlu0 %1763
          %v1767 = vadd.f32 %v1757, %v1762
          %v1768 = vadd.f32 %v1758, %v1764
          %v1769 = vadd.f32 %v1767, %v1730
          %v1770 = vadd.f32 %v1768, %v1734
          %1773 = vrot.lane.b32.xlu0 %v1730, 64
          %v1774 = vpop.permute.xlu0 %1773
          %1775 = vrot.lane.b32.xlu0 %v1734, 64
          %v1776 = vpop.permute.xlu0 %1775
          %v1779 = vadd.f32 %v1769, %v1774
          %v1780 = vadd.f32 %v1770, %v1776
          %vm1781 = vcmask 523264
          %v1782 = vsel %vm1781, %v1779, 0.0
          %v1783 = vsel %vm1781, %v1780, 0.0
          %v1784 = vadd.f32 %v1782, %v1783
          %v1785 = vrot.slane %v1784, 4
          %v1786 = vadd.f32 %v1784, %v1785
          %v1787 = vrot.slane %v1786, 2
          %v1788 = vadd.f32 %v1786, %v1787
          %v1789 = vrot.slane %v1788, 1
          %v1790 = vadd.f32 %v1788, %v1789
          %v1791 = vld [vmem:[#allocation4] sm:$0x1]
          %v1792 = vmul.f32 %v1790, 0.5
          %v1793 = vadd.f32 %v1791, %v1792
          %vm1794 = vcmask 516096
          %1795 = vst.msk [vmem:[#allocation4] sm:$0x1] %vm1794, %v1793
        $region48: #{tpu_custom_call.1} parent=23 // pred_fallthru
          _
        // Predicated region
        $region49: #{tpu_custom_call.1} parent=23 // pred_check
          %p1796 = pneg %p71
        $region50: #{tpu_custom_call.1} parent=23 // pred_check_branch
          %1798 = sbr.rel (%p1796) target = $region52
        $region51: #{tpu_custom_call.1} parent=23 // pred_region
          %1800 = vsyncadd [#allocation9], 0
          %s1801 = smul.addr %s20, 2
          %s1802 = scalar_lea.hbm %s2, %s1801
          %s1804 = sshll.u32 [#allocation10], 4
          %s1805 = int_to_ptr.vmem [resolvable:$true] %s1804
          %s1806 = sshll.u32 %s1802, 4
          %s1807 = int_to_ptr.hbm [resolvable:$true] %s1806
          %1809 = dma.vmem_to_hbm [thread:$0]  %s1805, 32, %s1807, [#allocation9]
        $region52: #{tpu_custom_call.1} parent=23 // pred_fallthru
          _
        // Predicated region
        $region53: #{tpu_custom_call.1} parent=23 // pred_check
          %p1810 = pneg %p71
        $region54: #{tpu_custom_call.1} parent=23 // pred_check_branch
          %1812 = sbr.rel (%p1810) target = $region56
        $region55: #{tpu_custom_call.1} parent=23 // pred_region
          %1814 = dma.done [#allocation9], 32
        $region56: #{tpu_custom_call.1} parent=23 // pred_fallthru
          _
      $region24: #{tpu_custom_call.1} parent=5 // pred_fallthru
        _
      %p1815 = scmp.le.s32.totalorder 2, %s10
      // Predicated region
      $region57: #{tpu_custom_call.1} parent=5 // pred_check
        %p1816 = pneg %p1815
      $region58: #{tpu_custom_call.1} parent=5 // pred_check_branch
        %1818 = sbr.rel (%p1816) target = $region60
      $region59: #{tpu_custom_call.1} parent=5 // pred_region
        %s1819 = ssub.s32 %s10, 2
      $region60: #{tpu_custom_call.1} parent=5 // pred_fallthru
        _
    $region6: #{tpu_custom_call.1} parent=1 // loop_footer
      %s14 = sadd.s32 1, %s10
    $region7: #{tpu_custom_call.1} parent=1 // loop_footer_branch
      %9 = sbr.rel target = $region3
    $region8: #{tpu_custom_call.1} parent=1 // loop_exit
      _
    %1820 = vsyncpa [#allocation8], 1
    %s1821 = scalar_lea.sflag [#allocation8], 1
    %1822 = vsyncpa %s1821, 1
    %1823 = vsyncpa [#allocation9], 1
    %s1824 = scalar_lea.sflag [#allocation9], 1
    %1825 = vsyncpa %s1824, 1
  %1826 = vsyncmov [#allocation6]
  %s1827 = vpop.sfrf %1826
  %p1828 = scmp.eq.s32.totalorder %s1827, 0
  %p1829 = pneg %p1828
  %1831 = shalt.err (%p1829)

</llo_original>
